<compile_context>
chip_gen: v7x
topology: tpu7x:2x2x1
jax: 0.10.0
libtpu: 0.0.40
codegen_flags: <defaults>
</compile_context>

<pallas_src>
import functools

import jax
import jax.numpy as jnp
from jax import lax
from jax.experimental import pallas as pl
from jax.experimental.pallas import tpu as pltpu

# ---- small synthetic config (ViT-S family, scaled down) --------------------
PATCH = 16
IMG = 32                 # 2x2 = 4 patches
IN_CHANS = 3
EMBED_DIM = 64
DEPTH = 2
NUM_HEADS = 4
HEAD_DIM = EMBED_DIM // NUM_HEADS
MLP_HIDDEN = 4 * EMBED_DIM
NUM_CLASSES = 10
HEAD_PAD = 128           # lane-dense classifier output (>=128 lanes)
SEQ_PAD = 8              # tokens padded to a sublane multiple (real seq = 5)
LN_EPS = 1e-6


# --------------------------- in-kernel helpers -------------------------------
def _ln(x, g, b):
    """LayerNorm in f32. x: [M, D]; g, b: [1, D]."""
    mean = jnp.mean(x, axis=-1, keepdims=True)
    var = jnp.mean((x - mean) ** 2, axis=-1, keepdims=True)
    return (x - mean) * lax.rsqrt(var + LN_EPS) * g + b


def _mm(x, w, bias=None):
    """bf16 MXU matmul with f32 accumulation (+ optional f32 bias [1, N])."""
    acc = jnp.dot(x.astype(jnp.bfloat16), w.astype(jnp.bfloat16),
                  preferred_element_type=jnp.float32)
    if bias is not None:
        acc = acc + bias
    return acc


# ----------------------------- fused ViT kernel ------------------------------
def _vit_kernel(xp_ref, patch_w_ref, stem_const_ref,
                qkv_w_ref, qkv_b_ref, proj_w_ref,
                fc1_w_ref, fc1_b_ref, fc2_w_ref, ln_ref,
                head_w_ref, head_norm_ref, head_b_ref,
                o_ref, slab_ref,
                *, seq_real, num_heads, head_dim, num_layers):
    """grid = (batch, layer).  slab_ref carries the [S_pad, D] token slab across layers."""
    layer = pl.program_id(1)

    # ---- stem (layer == 0): patch-embed matmul + cls token + positional embedding ----
    # xp already has a zero row 0 (cls slot) and zero pad rows; stem_const holds
    # cls_token + pos[0] in row 0, pos[1:] + patch_bias in rows 1..n_patches, zeros after.
    @pl.when(layer == 0)
    def _stem():
        tok = jnp.dot(xp_ref[0].astype(jnp.bfloat16),
                      patch_w_ref[...].astype(jnp.bfloat16),
                      preferred_element_type=jnp.float32)           # [S_pad, D]
        slab_ref[...] = tok + stem_const_ref[...]

    dm = num_heads * head_dim
    ln = ln_ref[0]                      # [6, D]: ln1_g, ln1_b, ln2_g, ln2_b, proj_b, fc2_b

    # ---- transformer block `layer` (pre-LN), everything register/VMEM resident ----
    x = slab_ref[...]                                               # [S_pad, D] f32
    y = _ln(x, ln[0:1, :], ln[1:2, :])
    qkv = _mm(y, qkv_w_ref[0], qkv_b_ref[0])                        # [S_pad, 3*D] f32

    spad = x.shape[0]
    key_ok = lax.broadcasted_iota(jnp.int32, (1, spad), 1) < seq_real   # mask pad keys
    heads = []
    # Short unrolled head loop (H=4); per-head data stays in vregs, no VMEM stores.
    # TODO(synk): at real ViT-S sizes switch to batched (H,) dot_general / einsum here.
    for h in range(num_heads):
        c0 = h * head_dim
        q_h = qkv[:, c0:c0 + head_dim]                # scale already folded into qkv_w
        k_h = qkv[:, dm + c0:dm + c0 + head_dim]
        v_h = qkv[:, 2 * dm + c0:2 * dm + c0 + head_dim]
        s = lax.dot_general(q_h.astype(jnp.bfloat16), k_h.astype(jnp.bfloat16),
                            (((1,), (1,)), ((), ())),
                            preferred_element_type=jnp.float32)     # [S_pad, S_pad]
        s = jnp.where(key_ok, s, -1e30)
        m = jnp.max(s, axis=-1, keepdims=True)
        p = jnp.exp(s - m)
        p = p * pl.reciprocal(jnp.sum(p, axis=-1, keepdims=True), approx=True)
        heads.append(jnp.dot(p.astype(jnp.bfloat16), v_h.astype(jnp.bfloat16),
                             preferred_element_type=jnp.float32))   # [S_pad, head_dim]
    attn = jnp.concatenate(heads, axis=-1)                          # [S_pad, D] (registers)

    h1 = x + _mm(attn, proj_w_ref[0], ln[4:5, :])                   # attn residual
    y2 = _ln(h1, ln[2:3, :], ln[3:4, :])
    hid = jax.nn.gelu(_mm(y2, fc1_w_ref[0], fc1_b_ref[0]), approximate=True)   # tanh -> EUP
    h2 = h1 + _mm(hid, fc2_w_ref[0], ln[5:6, :])                    # mlp residual
    slab_ref[...] = h2

    # ---- head epilogue (last layer): final LN on cls token + lane-padded classifier ----
    @pl.when(layer == num_layers - 1)
    def _head():
        y_cls = _ln(h2[0:1, :], head_norm_ref[0:1, :], head_norm_ref[1:2, :])
        o_ref[0] = _mm(y_cls, head_w_ref[...], head_b_ref[...]).astype(o_ref.dtype)


# ----------------------------- param packing ---------------------------------
def _pack_params(params, n_patches):
    """Stack per-layer params over DEPTH, fold the attention scale, pad/concat vectors."""
    D = EMBED_DIM
    scale = HEAD_DIM ** -0.5
    qscale = jnp.concatenate([jnp.full((D,), scale, jnp.float32),
                              jnp.ones((2 * D,), jnp.float32)])     # scale only Q columns
    blocks = params["blocks"]

    pk = {
        "patch_w": params["patch_w"].astype(jnp.bfloat16),                      # [CPP, D]
        "qkv_w": jnp.stack([b["qkv_w"] * qscale[None, :] for b in blocks]
                           ).astype(jnp.bfloat16),                              # [L, D, 3D]
        "qkv_b": jnp.stack([(b["qkv_b"] * qscale).reshape(1, 3 * D)
                            for b in blocks]),                                  # [L, 1, 3D]
        "proj_w": jnp.stack([b["proj_w"] for b in blocks]).astype(jnp.bfloat16),
        "fc1_w": jnp.stack([b["fc1_w"] for b in blocks]).astype(jnp.bfloat16),
        "fc1_b": jnp.stack([b["fc1_b"].reshape(1, MLP_HIDDEN) for b in blocks]),
        "fc2_w": jnp.stack([b["fc2_w"] for b in blocks]).astype(jnp.bfloat16),
        "ln_vecs": jnp.stack([jnp.stack([b["ln1_g"], b["ln1_b"],
                                         b["ln2_g"], b["ln2_b"],
                                         b["proj_b"], b["fc2_b"]])
                              for b in blocks]),                                # [L, 6, D]
        "head_w": params["head_w_pad"].astype(jnp.bfloat16),                    # [D, 128]
        "head_b": params["head_b_pad"],                                         # [1, 128]
        "head_norm": jnp.stack([params["norm_g"], params["norm_b"]]),           # [2, D]
    }

    # Stem constant slab: row0 = cls_token + pos[0]; rows 1..N = pos[1:] + patch_bias; pad=0.
    pos = params["pos_embed"].reshape(-1, D)                                    # [S, D]
    cls_row = params["cls_token"].reshape(1, D) + pos[0:1, :]
    patch_rows = pos[1:, :] + params["patch_b"][None, :]
    stem_const = jnp.zeros((SEQ_PAD, D), jnp.float32)
    stem_const = stem_const.at[0:1, :].set(cls_row)
    stem_const = stem_const.at[1:1 + n_patches, :].set(patch_rows)
    pk["stem_const"] = stem_const
    return pk


# ----------------------------- ViT forward ------------------------------------
def vit_forward(x, params):
    B, C, H, W = x.shape
    gh, gw = H // PATCH, W // PATCH
    n_patches = gh * gw
    cpp = C * PATCH * PATCH
    assert n_patches + 1 <= SEQ_PAD

    # Patch extraction (Conv2d(C, D, k=P, s=P) == unfold + matmul); flattening order
    # (C, ph, pw) matches PyTorch conv-weight flattening.  Pure layout plumbing in JAX.
    xp = x.reshape(B, C, gh, PATCH, gw, PATCH).transpose(0, 2, 4, 1, 3, 5)
    xp = xp.reshape(B, n_patches, cpp)
    # Row 0 reserved for the cls token (zeros -> stem_const supplies it); pad rows zero.
    xp_pad = jnp.zeros((B, SEQ_PAD, cpp), jnp.bfloat16)
    xp_pad = xp_pad.at[:, 1:1 + n_patches, :].set(xp.astype(jnp.bfloat16))

    pk = _pack_params(params, n_patches)
    D, S, HD3, MH = EMBED_DIM, SEQ_PAD, 3 * EMBED_DIM, MLP_HIDDEN

    kern = functools.partial(_vit_kernel, seq_real=n_patches + 1,
                             num_heads=NUM_HEADS, head_dim=HEAD_DIM,
                             num_layers=DEPTH)
    out = pl.pallas_call(
        kern,
        out_shape=jax.ShapeDtypeStruct((B, 1, HEAD_PAD), jnp.float32),
        grid_spec=pltpu.PrefetchScalarGridSpec(
            num_scalar_prefetch=0,
            grid=(B, DEPTH),                       # (parallel batch, sequential layers)
            in_specs=[
                pl.BlockSpec((1, S, cpp), lambda b, d: (b, 0, 0)),   # xp_pad
                pl.BlockSpec((cpp, D), lambda b, d: (0, 0)),         # patch_w
                pl.BlockSpec((S, D), lambda b, d: (0, 0)),           # stem_const
                pl.BlockSpec((1, D, HD3), lambda b, d: (d, 0, 0)),   # qkv_w
                pl.BlockSpec((1, 1, HD3), lambda b, d: (d, 0, 0)),   # qkv_b
                pl.BlockSpec((1, D, D), lambda b, d: (d, 0, 0)),     # proj_w
                pl.BlockSpec((1, D, MH), lambda b, d: (d, 0, 0)),    # fc1_w
                pl.BlockSpec((1, 1, MH), lambda b, d: (d, 0, 0)),    # fc1_b
                pl.BlockSpec((1, MH, D), lambda b, d: (d, 0, 0)),    # fc2_w
                pl.BlockSpec((1, 6, D), lambda b, d: (d, 0, 0)),     # ln/bias slab
                pl.BlockSpec((D, HEAD_PAD), lambda b, d: (0, 0)),    # head_w (padded)
                pl.BlockSpec((2, D), lambda b, d: (0, 0)),           # head norm g/b
                pl.BlockSpec((1, HEAD_PAD), lambda b, d: (0, 0)),    # head bias (padded)
            ],
            out_specs=pl.BlockSpec((1, 1, HEAD_PAD), lambda b, d: (b, 0, 0)),
            scratch_shapes=[pltpu.VMEM((SEQ_PAD, EMBED_DIM), jnp.float32)],  # token slab
        ),
        compiler_params=pltpu.CompilerParams(
            dimension_semantics=("parallel", "arbitrary")),
    )(xp_pad, pk["patch_w"], pk["stem_const"],
      pk["qkv_w"], pk["qkv_b"], pk["proj_w"],
      pk["fc1_w"], pk["fc1_b"], pk["fc2_w"], pk["ln_vecs"],
      pk["head_w"], pk["head_norm"], pk["head_b"])

    return out.reshape(B, HEAD_PAD)[:, :NUM_CLASSES]


# ----------------------------- parameter init ----------------------------------
def init_params(key):
    def nrm(k, shape):
        return 0.02 * jax.random.normal(k, shape, dtype=jnp.float32)

    keys = jax.random.split(key, 4 + DEPTH)
    head_w = nrm(keys[3], (EMBED_DIM, NUM_CLASSES))
    head_w_pad = jnp.zeros((EMBED_DIM, HEAD_PAD), jnp.float32).at[:, :NUM_CLASSES].set(head_w)
    params = {
        "patch_w": nrm(keys[0], (IN_CHANS * PATCH * PATCH, EMBED_DIM)),
        "patch_b": jnp.zeros((EMBED_DIM,), jnp.float32),
        "cls_token": nrm(keys[1], (1, 1, EMBED_DIM)),
        "pos_embed": nrm(keys[2], (1, (IMG // PATCH) ** 2 + 1, EMBED_DIM)),
        "norm_g": jnp.ones((EMBED_DIM,), jnp.float32),
        "norm_b": jnp.zeros((EMBED_DIM,), jnp.float32),
        "head_w_pad": head_w_pad,                       # lane-padded to 128 (zeros)
        "head_b_pad": jnp.zeros((1, HEAD_PAD), jnp.float32),
        "blocks": [],
    }
    for d in range(DEPTH):
        bk = jax.random.split(keys[4 + d], 4)
        params["blocks"].append({
            "ln1_g": jnp.ones((EMBED_DIM,), jnp.float32),
            "ln1_b": jnp.zeros((EMBED_DIM,), jnp.float32),
            "qkv_w": nrm(bk[0], (EMBED_DIM, 3 * EMBED_DIM)),
            "qkv_b": jnp.zeros((3 * EMBED_DIM,), jnp.float32),
            "proj_w": nrm(bk[1], (EMBED_DIM, EMBED_DIM)),
            "proj_b": jnp.zeros((EMBED_DIM,), jnp.float32),
            "ln2_g": jnp.ones((EMBED_DIM,), jnp.float32),
            "ln2_b": jnp.zeros((EMBED_DIM,), jnp.float32),
            "fc1_w": nrm(bk[2], (EMBED_DIM, MLP_HIDDEN)),
            "fc1_b": jnp.zeros((MLP_HIDDEN,), jnp.float32),
            "fc2_w": nrm(bk[3], (MLP_HIDDEN, EMBED_DIM)),
            "fc2_b": jnp.zeros((EMBED_DIM,), jnp.float32),
        })
    return params


if __name__ == "__main__":
    key = jax.random.PRNGKey(0)
    pkey, xkey = jax.random.split(key)
    params = init_params(pkey)
    x = jax.random.normal(xkey, (2, IN_CHANS, IMG, IMG), dtype=jnp.float32)   # NCHW like PyTorch

    logits = jax.jit(vit_forward)(x, params)
    logits = jax.block_until_ready(logits)
    assert logits.shape == (2, NUM_CLASSES), logits.shape
    assert bool(jnp.all(jnp.isfinite(logits)))
    print("KERNEL_OK")
</pallas_src>

<mosaic_0001>
module attributes {stable_mosaic.version = 11 : i64} {
  func.func @_vit_kernel(%arg0: i32, %arg1: i32, %arg2: memref<1x8x768xbf16, #tpu.memory_space<vmem>>, %arg3: memref<768x64xbf16, #tpu.memory_space<vmem>>, %arg4: memref<8x64xf32, #tpu.memory_space<vmem>>, %arg5: memref<1x64x192xbf16, #tpu.memory_space<vmem>>, %arg6: memref<1x1x192xf32, #tpu.memory_space<vmem>>, %arg7: memref<1x64x64xbf16, #tpu.memory_space<vmem>>, %arg8: memref<1x64x256xbf16, #tpu.memory_space<vmem>>, %arg9: memref<1x1x256xf32, #tpu.memory_space<vmem>>, %arg10: memref<1x256x64xbf16, #tpu.memory_space<vmem>>, %arg11: memref<1x6x64xf32, #tpu.memory_space<vmem>>, %arg12: memref<64x128xbf16, #tpu.memory_space<vmem>>, %arg13: memref<2x64xf32, #tpu.memory_space<vmem>>, %arg14: memref<1x128xf32, #tpu.memory_space<vmem>>, %arg15: memref<1x1x128xf32, #tpu.memory_space<vmem>>, %arg16: memref<8x64xf32, #tpu.memory_space<vmem>>) attributes {dimension_semantics = [#tpu.dimension_semantics<parallel>, #tpu.dimension_semantics<arbitrary>], iteration_bounds = array<i64: 2, 2>, scalar_prefetch = 0 : i64, scratch_operands = 1 : i64, tpu.core_type = #tpu.core_type<tc>, window_params = [{transform_indices = @transform_0, window_bounds = array<i64: 1, 8, 768>}, {pipeline_mode = #tpu.pipeline_mode<synchronous>, transform_indices = @transform_1, window_bounds = array<i64: 768, 64>}, {pipeline_mode = #tpu.pipeline_mode<synchronous>, transform_indices = @transform_2, window_bounds = array<i64: 8, 64>}, {transform_indices = @transform_3, window_bounds = array<i64: 1, 64, 192>}, {transform_indices = @transform_4, window_bounds = array<i64: 1, 1, 192>}, {transform_indices = @transform_5, window_bounds = array<i64: 1, 64, 64>}, {transform_indices = @transform_6, window_bounds = array<i64: 1, 64, 256>}, {transform_indices = @transform_7, window_bounds = array<i64: 1, 1, 256>}, {transform_indices = @transform_8, window_bounds = array<i64: 1, 256, 64>}, {transform_indices = @transform_9, window_bounds = array<i64: 1, 6, 64>}, {pipeline_mode = #tpu.pipeline_mode<synchronous>, transform_indices = @transform_10, window_bounds = array<i64: 64, 128>}, {pipeline_mode = #tpu.pipeline_mode<synchronous>, transform_indices = @transform_11, window_bounds = array<i64: 2, 64>}, {pipeline_mode = #tpu.pipeline_mode<synchronous>, transform_indices = @transform_12, window_bounds = array<i64: 1, 128>}, {transform_indices = @transform_13, window_bounds = array<i64: 1, 1, 128>}]} {
    %c0_i32 = arith.constant 0 : i32
    %0 = arith.cmpi eq, %arg1, %c0_i32 : i32
    %1 = arith.extui %0 : i1 to i32
    %c0_i32_0 = arith.constant 0 : i32
    %2 = arith.cmpi ne, %1, %c0_i32_0 : i32
    scf.if %2 {
      %c0_63 = arith.constant 0 : index
      %c0_64 = arith.constant 0 : index
      %c0_65 = arith.constant 0 : index
      %199 = vector.load %arg2[%c0_63, %c0_64, %c0_65] : memref<1x8x768xbf16, #tpu.memory_space<vmem>>, vector<1x8x768xbf16>
      %200 = vector.shape_cast %199 : vector<1x8x768xbf16> to vector<8x768xbf16>
      %c0_66 = arith.constant 0 : index
      %c0_67 = arith.constant 0 : index
      %201 = vector.load %arg3[%c0_66, %c0_67] : memref<768x64xbf16, #tpu.memory_space<vmem>>, vector<768x64xbf16>
      %cst_68 = arith.constant dense<0.000000e+00> : vector<8x64xf32>
      %202 = tpu.matmul %200, %201, %cst_68 {dimension_numbers = #tpu.dot_dimension_numbers<[1], [0], [0], [1], [0, 0, 1, 1], [], []>} : vector<8x768xbf16>, vector<768x64xbf16>, vector<8x64xf32> -> vector<8x64xf32>
      %c0_69 = arith.constant 0 : index
      %c0_70 = arith.constant 0 : index
      %203 = vector.load %arg4[%c0_69, %c0_70] : memref<8x64xf32, #tpu.memory_space<vmem>>, vector<8x64xf32>
      %204 = arith.addf %202, %203 : vector<8x64xf32>
      %c0_71 = arith.constant 0 : index
      %c0_72 = arith.constant 0 : index
      %205 = vector.load %arg16[%c0_71, %c0_72] : memref<8x64xf32, #tpu.memory_space<vmem>>, vector<8x64xf32>
      tpu.vector_store %arg16[%c0_71, %c0_72], %204 {strides = array<i32>} : memref<8x64xf32, #tpu.memory_space<vmem>>, vector<8x64xf32>,
    } else {
    }
    %c0 = arith.constant 0 : index
    %c0_1 = arith.constant 0 : index
    %c0_2 = arith.constant 0 : index
    %3 = vector.load %arg11[%c0, %c0_1, %c0_2] : memref<1x6x64xf32, #tpu.memory_space<vmem>>, vector<1x6x64xf32>
    %4 = vector.shape_cast %3 : vector<1x6x64xf32> to vector<6x64xf32>
    %c0_3 = arith.constant 0 : index
    %c0_4 = arith.constant 0 : index
    %5 = vector.load %arg16[%c0_3, %c0_4] : memref<8x64xf32, #tpu.memory_space<vmem>>, vector<8x64xf32>
    %6 = vector.extract_strided_slice %4 {offsets = [0, 0], sizes = [1, 64], strides = [1, 1]} : vector<6x64xf32> to vector<1x64xf32>
    %7 = vector.extract_strided_slice %4 {offsets = [1, 0], sizes = [1, 64], strides = [1, 1]} : vector<6x64xf32> to vector<1x64xf32>
    %cst = arith.constant dense<0.000000e+00> : vector<8xf32>
    %8 = vector.multi_reduction <add>, %5, %cst [1] : vector<8x64xf32> to vector<8xf32>
    %9 = vector.shape_cast %8 : vector<8xf32> to vector<8x1xf32>
    %cst_5 = arith.constant 6.400000e+01 : f32
    %10 = vector.broadcast %cst_5 : f32 to vector<8x1xf32>
    %11 = arith.divf %9, %10 : vector<8x1xf32>
    %12 = vector.broadcast %11 : vector<8x1xf32> to vector<8x64xf32>
    %13 = arith.subf %5, %12 : vector<8x64xf32>
    %14 = arith.mulf %13, %13 : vector<8x64xf32>
    %cst_6 = arith.constant dense<0.000000e+00> : vector<8xf32>
    %15 = vector.multi_reduction <add>, %14, %cst_6 [1] : vector<8x64xf32> to vector<8xf32>
    %16 = vector.shape_cast %15 : vector<8xf32> to vector<8x1xf32>
    %cst_7 = arith.constant 6.400000e+01 : f32
    %17 = vector.broadcast %cst_7 : f32 to vector<8x1xf32>
    %18 = arith.divf %16, %17 : vector<8x1xf32>
    %19 = vector.broadcast %11 : vector<8x1xf32> to vector<8x64xf32>
    %20 = arith.subf %5, %19 : vector<8x64xf32>
    %cst_8 = arith.constant 9.99999997E-7 : f32
    %21 = vector.broadcast %cst_8 : f32 to vector<8x1xf32>
    %22 = arith.addf %18, %21 : vector<8x1xf32>
    %23 = math.rsqrt %22 : vector<8x1xf32>
    %24 = vector.broadcast %23 : vector<8x1xf32> to vector<8x64xf32>
    %25 = arith.mulf %20, %24 : vector<8x64xf32>
    %26 = vector.broadcast %6 : vector<1x64xf32> to vector<8x64xf32>
    %27 = arith.mulf %25, %26 : vector<8x64xf32>
    %28 = vector.broadcast %7 : vector<1x64xf32> to vector<8x64xf32>
    %29 = arith.addf %27, %28 : vector<8x64xf32>
    %c0_9 = arith.constant 0 : index
    %c0_10 = arith.constant 0 : index
    %c0_11 = arith.constant 0 : index
    %30 = vector.load %arg5[%c0_9, %c0_10, %c0_11] : memref<1x64x192xbf16, #tpu.memory_space<vmem>>, vector<1x64x192xbf16>
    %31 = vector.shape_cast %30 : vector<1x64x192xbf16> to vector<64x192xbf16>
    %c0_12 = arith.constant 0 : index
    %c0_13 = arith.constant 0 : index
    %c0_14 = arith.constant 0 : index
    %32 = vector.load %arg6[%c0_12, %c0_13, %c0_14] : memref<1x1x192xf32, #tpu.memory_space<vmem>>, vector<1x1x192xf32>
    %33 = vector.shape_cast %32 : vector<1x1x192xf32> to vector<1x192xf32>
    %34 = arith.truncf %29 : vector<8x64xf32> to vector<8x64xbf16>
    %cst_15 = arith.constant dense<0.000000e+00> : vector<8x192xf32>
    %35 = tpu.matmul %34, %31, %cst_15 {dimension_numbers = #tpu.dot_dimension_numbers<[1], [0], [0], [1], [0, 0, 1, 1], [], []>} : vector<8x64xbf16>, vector<64x192xbf16>, vector<8x192xf32> -> vector<8x192xf32>
    %36 = vector.broadcast %33 : vector<1x192xf32> to vector<8x192xf32>
    %37 = arith.addf %35, %36 : vector<8x192xf32>
    %38 = tpu.iota {dimensions = array<i32: 1>} : vector<1x8xi32>
    %c5_i32 = arith.constant 5 : i32
    %39 = vector.broadcast %c5_i32 : i32 to vector<1x8xi32>
    %40 = arith.cmpi slt, %38, %39 : vector<1x8xi32>
    %41 = vector.extract_strided_slice %37 {offsets = [0, 0], sizes = [8, 16], strides = [1, 1]} : vector<8x192xf32> to vector<8x16xf32>
    %42 = vector.extract_strided_slice %37 {offsets = [0, 64], sizes = [8, 16], strides = [1, 1]} : vector<8x192xf32> to vector<8x16xf32>
    %43 = vector.extract_strided_slice %37 {offsets = [0, 128], sizes = [8, 16], strides = [1, 1]} : vector<8x192xf32> to vector<8x16xf32>
    %44 = arith.truncf %41 : vector<8x16xf32> to vector<8x16xbf16>
    %45 = arith.truncf %42 : vector<8x16xf32> to vector<8x16xbf16>
    %cst_16 = arith.constant dense<0.000000e+00> : vector<8x8xf32>
    %46 = tpu.matmul %44, %45, %cst_16 {dimension_numbers = #tpu.dot_dimension_numbers<[1], [1], [0], [0], [0, 0, 1, 0], [], []>} : vector<8x16xbf16>, vector<8x16xbf16>, vector<8x8xf32> -> vector<8x8xf32>
    %cst_17 = arith.constant -1.000000e+30 : f32
    %47 = vector.shape_cast %40 : vector<1x8xi1> to vector<1x8xi1>
    %48 = vector.broadcast %47 : vector<1x8xi1> to vector<8x8xi1>
    %49 = vector.broadcast %cst_17 : f32 to vector<8x8xf32>
    %50 = arith.select %48, %46, %49 : vector<8x8xi1>, vector<8x8xf32>
    %cst_18 = arith.constant dense<0xFF800000> : vector<8xf32>
    %51 = vector.multi_reduction <maximumf>, %50, %cst_18 [1] : vector<8x8xf32> to vector<8xf32>
    %52 = vector.shape_cast %51 : vector<8xf32> to vector<8x1xf32>
    %53 = vector.broadcast %52 : vector<8x1xf32> to vector<8x8xf32>
    %54 = arith.subf %50, %53 : vector<8x8xf32>
    %55 = math.exp %54 : vector<8x8xf32>
    %cst_19 = arith.constant dense<0.000000e+00> : vector<8xf32>
    %56 = vector.multi_reduction <add>, %55, %cst_19 [1] : vector<8x8xf32> to vector<8xf32>
    %57 = vector.shape_cast %56 : vector<8xf32> to vector<8x1xf32>
    %58 = tpu.reciprocal %57 {approx = true} : vector<8x1xf32> -> vector<8x1xf32>
    %59 = vector.broadcast %58 : vector<8x1xf32> to vector<8x8xf32>
    %60 = arith.mulf %55, %59 : vector<8x8xf32>
    %61 = arith.truncf %60 : vector<8x8xf32> to vector<8x8xbf16>
    %62 = arith.truncf %43 : vector<8x16xf32> to vector<8x16xbf16>
    %cst_20 = arith.constant dense<0.000000e+00> : vector<8x16xf32>
    %63 = tpu.matmul %61, %62, %cst_20 {dimension_numbers = #tpu.dot_dimension_numbers<[1], [0], [0], [1], [0, 0, 1, 1], [], []>} : vector<8x8xbf16>, vector<8x16xbf16>, vector<8x16xf32> -> vector<8x16xf32>
    %64 = vector.extract_strided_slice %37 {offsets = [0, 16], sizes = [8, 16], strides = [1, 1]} : vector<8x192xf32> to vector<8x16xf32>
    %65 = vector.extract_strided_slice %37 {offsets = [0, 80], sizes = [8, 16], strides = [1, 1]} : vector<8x192xf32> to vector<8x16xf32>
    %66 = vector.extract_strided_slice %37 {offsets = [0, 144], sizes = [8, 16], strides = [1, 1]} : vector<8x192xf32> to vector<8x16xf32>
    %67 = arith.truncf %64 : vector<8x16xf32> to vector<8x16xbf16>
    %68 = arith.truncf %65 : vector<8x16xf32> to vector<8x16xbf16>
    %cst_21 = arith.constant dense<0.000000e+00> : vector<8x8xf32>
    %69 = tpu.matmul %67, %68, %cst_21 {dimension_numbers = #tpu.dot_dimension_numbers<[1], [1], [0], [0], [0, 0, 1, 0], [], []>} : vector<8x16xbf16>, vector<8x16xbf16>, vector<8x8xf32> -> vector<8x8xf32>
    %cst_22 = arith.constant -1.000000e+30 : f32
    %70 = vector.shape_cast %40 : vector<1x8xi1> to vector<1x8xi1>
    %71 = vector.broadcast %70 : vector<1x8xi1> to vector<8x8xi1>
    %72 = vector.broadcast %cst_22 : f32 to vector<8x8xf32>
    %73 = arith.select %71, %69, %72 : vector<8x8xi1>, vector<8x8xf32>
    %cst_23 = arith.constant dense<0xFF800000> : vector<8xf32>
    %74 = vector.multi_reduction <maximumf>, %73, %cst_23 [1] : vector<8x8xf32> to vector<8xf32>
    %75 = vector.shape_cast %74 : vector<8xf32> to vector<8x1xf32>
    %76 = vector.broadcast %75 : vector<8x1xf32> to vector<8x8xf32>
    %77 = arith.subf %73, %76 : vector<8x8xf32>
    %78 = math.exp %77 : vector<8x8xf32>
    %cst_24 = arith.constant dense<0.000000e+00> : vector<8xf32>
    %79 = vector.multi_reduction <add>, %78, %cst_24 [1] : vector<8x8xf32> to vector<8xf32>
    %80 = vector.shape_cast %79 : vector<8xf32> to vector<8x1xf32>
    %81 = tpu.reciprocal %80 {approx = true} : vector<8x1xf32> -> vector<8x1xf32>
    %82 = vector.broadcast %81 : vector<8x1xf32> to vector<8x8xf32>
    %83 = arith.mulf %78, %82 : vector<8x8xf32>
    %84 = arith.truncf %83 : vector<8x8xf32> to vector<8x8xbf16>
    %85 = arith.truncf %66 : vector<8x16xf32> to vector<8x16xbf16>
    %cst_25 = arith.constant dense<0.000000e+00> : vector<8x16xf32>
    %86 = tpu.matmul %84, %85, %cst_25 {dimension_numbers = #tpu.dot_dimension_numbers<[1], [0], [0], [1], [0, 0, 1, 1], [], []>} : vector<8x8xbf16>, vector<8x16xbf16>, vector<8x16xf32> -> vector<8x16xf32>
    %87 = vector.extract_strided_slice %37 {offsets = [0, 32], sizes = [8, 16], strides = [1, 1]} : vector<8x192xf32> to vector<8x16xf32>
    %88 = vector.extract_strided_slice %37 {offsets = [0, 96], sizes = [8, 16], strides = [1, 1]} : vector<8x192xf32> to vector<8x16xf32>
    %89 = vector.extract_strided_slice %37 {offsets = [0, 160], sizes = [8, 16], strides = [1, 1]} : vector<8x192xf32> to vector<8x16xf32>
    %90 = arith.truncf %87 : vector<8x16xf32> to vector<8x16xbf16>
    %91 = arith.truncf %88 : vector<8x16xf32> to vector<8x16xbf16>
    %cst_26 = arith.constant dense<0.000000e+00> : vector<8x8xf32>
    %92 = tpu.matmul %90, %91, %cst_26 {dimension_numbers = #tpu.dot_dimension_numbers<[1], [1], [0], [0], [0, 0, 1, 0], [], []>} : vector<8x16xbf16>, vector<8x16xbf16>, vector<8x8xf32> -> vector<8x8xf32>
    %cst_27 = arith.constant -1.000000e+30 : f32
    %93 = vector.shape_cast %40 : vector<1x8xi1> to vector<1x8xi1>
    %94 = vector.broadcast %93 : vector<1x8xi1> to vector<8x8xi1>
    %95 = vector.broadcast %cst_27 : f32 to vector<8x8xf32>
    %96 = arith.select %94, %92, %95 : vector<8x8xi1>, vector<8x8xf32>
    %cst_28 = arith.constant dense<0xFF800000> : vector<8xf32>
    %97 = vector.multi_reduction <maximumf>, %96, %cst_28 [1] : vector<8x8xf32> to vector<8xf32>
    %98 = vector.shape_cast %97 : vector<8xf32> to vector<8x1xf32>
    %99 = vector.broadcast %98 : vector<8x1xf32> to vector<8x8xf32>
    %100 = arith.subf %96, %99 : vector<8x8xf32>
    %101 = math.exp %100 : vector<8x8xf32>
    %cst_29 = arith.constant dense<0.000000e+00> : vector<8xf32>
    %102 = vector.multi_reduction <add>, %101, %cst_29 [1] : vector<8x8xf32> to vector<8xf32>
    %103 = vector.shape_cast %102 : vector<8xf32> to vector<8x1xf32>
    %104 = tpu.reciprocal %103 {approx = true} : vector<8x1xf32> -> vector<8x1xf32>
    %105 = vector.broadcast %104 : vector<8x1xf32> to vector<8x8xf32>
    %106 = arith.mulf %101, %105 : vector<8x8xf32>
    %107 = arith.truncf %106 : vector<8x8xf32> to vector<8x8xbf16>
    %108 = arith.truncf %89 : vector<8x16xf32> to vector<8x16xbf16>
    %cst_30 = arith.constant dense<0.000000e+00> : vector<8x16xf32>
    %109 = tpu.matmul %107, %108, %cst_30 {dimension_numbers = #tpu.dot_dimension_numbers<[1], [0], [0], [1], [0, 0, 1, 1], [], []>} : vector<8x8xbf16>, vector<8x16xbf16>, vector<8x16xf32> -> vector<8x16xf32>
    %110 = vector.extract_strided_slice %37 {offsets = [0, 48], sizes = [8, 16], strides = [1, 1]} : vector<8x192xf32> to vector<8x16xf32>
    %111 = vector.extract_strided_slice %37 {offsets = [0, 112], sizes = [8, 16], strides = [1, 1]} : vector<8x192xf32> to vector<8x16xf32>
    %112 = vector.extract_strided_slice %37 {offsets = [0, 176], sizes = [8, 16], strides = [1, 1]} : vector<8x192xf32> to vector<8x16xf32>
    %113 = arith.truncf %110 : vector<8x16xf32> to vector<8x16xbf16>
    %114 = arith.truncf %111 : vector<8x16xf32> to vector<8x16xbf16>
    %cst_31 = arith.constant dense<0.000000e+00> : vector<8x8xf32>
    %115 = tpu.matmul %113, %114, %cst_31 {dimension_numbers = #tpu.dot_dimension_numbers<[1], [1], [0], [0], [0, 0, 1, 0], [], []>} : vector<8x16xbf16>, vector<8x16xbf16>, vector<8x8xf32> -> vector<8x8xf32>
    %cst_32 = arith.constant -1.000000e+30 : f32
    %116 = vector.shape_cast %40 : vector<1x8xi1> to vector<1x8xi1>
    %117 = vector.broadcast %116 : vector<1x8xi1> to vector<8x8xi1>
    %118 = vector.broadcast %cst_32 : f32 to vector<8x8xf32>
    %119 = arith.select %117, %115, %118 : vector<8x8xi1>, vector<8x8xf32>
    %cst_33 = arith.constant dense<0xFF800000> : vector<8xf32>
    %120 = vector.multi_reduction <maximumf>, %119, %cst_33 [1] : vector<8x8xf32> to vector<8xf32>
    %121 = vector.shape_cast %120 : vector<8xf32> to vector<8x1xf32>
    %122 = vector.broadcast %121 : vector<8x1xf32> to vector<8x8xf32>
    %123 = arith.subf %119, %122 : vector<8x8xf32>
    %124 = math.exp %123 : vector<8x8xf32>
    %cst_34 = arith.constant dense<0.000000e+00> : vector<8xf32>
    %125 = vector.multi_reduction <add>, %124, %cst_34 [1] : vector<8x8xf32> to vector<8xf32>
    %126 = vector.shape_cast %125 : vector<8xf32> to vector<8x1xf32>
    %127 = tpu.reciprocal %126 {approx = true} : vector<8x1xf32> -> vector<8x1xf32>
    %128 = vector.broadcast %127 : vector<8x1xf32> to vector<8x8xf32>
    %129 = arith.mulf %124, %128 : vector<8x8xf32>
    %130 = arith.truncf %129 : vector<8x8xf32> to vector<8x8xbf16>
    %131 = arith.truncf %112 : vector<8x16xf32> to vector<8x16xbf16>
    %cst_35 = arith.constant dense<0.000000e+00> : vector<8x16xf32>
    %132 = tpu.matmul %130, %131, %cst_35 {dimension_numbers = #tpu.dot_dimension_numbers<[1], [0], [0], [1], [0, 0, 1, 1], [], []>} : vector<8x8xbf16>, vector<8x16xbf16>, vector<8x16xf32> -> vector<8x16xf32>
    %133 = tpu.concatenate %63, %86, %109, %132 in 1 : vector<8x16xf32>, vector<8x16xf32>, vector<8x16xf32>, vector<8x16xf32> -> vector<8x64xf32>
    %c0_36 = arith.constant 0 : index
    %c0_37 = arith.constant 0 : index
    %c0_38 = arith.constant 0 : index
    %134 = vector.load %arg7[%c0_36, %c0_37, %c0_38] : memref<1x64x64xbf16, #tpu.memory_space<vmem>>, vector<1x64x64xbf16>
    %135 = vector.shape_cast %134 : vector<1x64x64xbf16> to vector<64x64xbf16>
    %136 = vector.extract_strided_slice %4 {offsets = [4, 0], sizes = [1, 64], strides = [1, 1]} : vector<6x64xf32> to vector<1x64xf32>
    %137 = arith.truncf %133 : vector<8x64xf32> to vector<8x64xbf16>
    %cst_39 = arith.constant dense<0.000000e+00> : vector<8x64xf32>
    %138 = tpu.matmul %137, %135, %cst_39 {dimension_numbers = #tpu.dot_dimension_numbers<[1], [0], [0], [1], [0, 0, 1, 1], [], []>} : vector<8x64xbf16>, vector<64x64xbf16>, vector<8x64xf32> -> vector<8x64xf32>
    %139 = vector.broadcast %136 : vector<1x64xf32> to vector<8x64xf32>
    %140 = arith.addf %138, %139 : vector<8x64xf32>
    %141 = arith.addf %5, %140 : vector<8x64xf32>
    %142 = vector.extract_strided_slice %4 {offsets = [2, 0], sizes = [1, 64], strides = [1, 1]} : vector<6x64xf32> to vector<1x64xf32>
    %143 = vector.extract_strided_slice %4 {offsets = [3, 0], sizes = [1, 64], strides = [1, 1]} : vector<6x64xf32> to vector<1x64xf32>
    %cst_40 = arith.constant dense<0.000000e+00> : vector<8xf32>
    %144 = vector.multi_reduction <add>, %141, %cst_40 [1] : vector<8x64xf32> to vector<8xf32>
    %145 = vector.shape_cast %144 : vector<8xf32> to vector<8x1xf32>
    %cst_41 = arith.constant 6.400000e+01 : f32
    %146 = vector.broadcast %cst_41 : f32 to vector<8x1xf32>
    %147 = arith.divf %145, %146 : vector<8x1xf32>
    %148 = vector.broadcast %147 : vector<8x1xf32> to vector<8x64xf32>
    %149 = arith.subf %141, %148 : vector<8x64xf32>
    %150 = arith.mulf %149, %149 : vector<8x64xf32>
    %cst_42 = arith.constant dense<0.000000e+00> : vector<8xf32>
    %151 = vector.multi_reduction <add>, %150, %cst_42 [1] : vector<8x64xf32> to vector<8xf32>
    %152 = vector.shape_cast %151 : vector<8xf32> to vector<8x1xf32>
    %cst_43 = arith.constant 6.400000e+01 : f32
    %153 = vector.broadcast %cst_43 : f32 to vector<8x1xf32>
    %154 = arith.divf %152, %153 : vector<8x1xf32>
    %155 = vector.broadcast %147 : vector<8x1xf32> to vector<8x64xf32>
    %156 = arith.subf %141, %155 : vector<8x64xf32>
    %cst_44 = arith.constant 9.99999997E-7 : f32
    %157 = vector.broadcast %cst_44 : f32 to vector<8x1xf32>
    %158 = arith.addf %154, %157 : vector<8x1xf32>
    %159 = math.rsqrt %158 : vector<8x1xf32>
    %160 = vector.broadcast %159 : vector<8x1xf32> to vector<8x64xf32>
    %161 = arith.mulf %156, %160 : vector<8x64xf32>
    %162 = vector.broadcast %142 : vector<1x64xf32> to vector<8x64xf32>
    %163 = arith.mulf %161, %162 : vector<8x64xf32>
    %164 = vector.broadcast %143 : vector<1x64xf32> to vector<8x64xf32>
    %165 = arith.addf %163, %164 : vector<8x64xf32>
    %c0_45 = arith.constant 0 : index
    %c0_46 = arith.constant 0 : index
    %c0_47 = arith.constant 0 : index
    %166 = vector.load %arg8[%c0_45, %c0_46, %c0_47] : memref<1x64x256xbf16, #tpu.memory_space<vmem>>, vector<1x64x256xbf16>
    %167 = vector.shape_cast %166 : vector<1x64x256xbf16> to vector<64x256xbf16>
    %c0_48 = arith.constant 0 : index
    %c0_49 = arith.constant 0 : index
    %c0_50 = arith.constant 0 : index
    %168 = vector.load %arg9[%c0_48, %c0_49, %c0_50] : memref<1x1x256xf32, #tpu.memory_space<vmem>>, vector<1x1x256xf32>
    %169 = vector.shape_cast %168 : vector<1x1x256xf32> to vector<1x256xf32>
    %170 = arith.truncf %165 : vector<8x64xf32> to vector<8x64xbf16>
    %cst_51 = arith.constant dense<0.000000e+00> : vector<8x256xf32>
    %171 = tpu.matmul %170, %167, %cst_51 {dimension_numbers = #tpu.dot_dimension_numbers<[1], [0], [0], [1], [0, 0, 1, 1], [], []>} : vector<8x64xbf16>, vector<64x256xbf16>, vector<8x256xf32> -> vector<8x256xf32>
    %172 = vector.broadcast %169 : vector<1x256xf32> to vector<8x256xf32>
    %173 = arith.addf %171, %172 : vector<8x256xf32>
    %174 = arith.mulf %173, %173 : vector<8x256xf32>
    %175 = arith.mulf %173, %174 : vector<8x256xf32>
    %cst_52 = arith.constant 4.471500e-02 : f32
    %176 = vector.broadcast %cst_52 : f32 to vector<8x256xf32>
    %177 = arith.mulf %176, %175 : vector<8x256xf32>
    %178 = arith.addf %173, %177 : vector<8x256xf32>
    %cst_53 = arith.constant 0.797884583 : f32
    %179 = vector.broadcast %cst_53 : f32 to vector<8x256xf32>
    %180 = arith.mulf %179, %178 : vector<8x256xf32>
    %181 = math.tanh %180 : vector<8x256xf32>
    %cst_54 = arith.constant 1.000000e+00 : f32
    %182 = vector.broadcast %cst_54 : f32 to vector<8x256xf32>
    %183 = arith.addf %182, %181 : vector<8x256xf32>
    %cst_55 = arith.constant 5.000000e-01 : f32
    %184 = vector.broadcast %cst_55 : f32 to vector<8x256xf32>
    %185 = arith.mulf %184, %183 : vector<8x256xf32>
    %186 = arith.mulf %173, %185 : vector<8x256xf32>
    %c0_56 = arith.constant 0 : index
    %c0_57 = arith.constant 0 : index
    %c0_58 = arith.constant 0 : index
    %187 = vector.load %arg10[%c0_56, %c0_57, %c0_58] : memref<1x256x64xbf16, #tpu.memory_space<vmem>>, vector<1x256x64xbf16>
    %188 = vector.shape_cast %187 : vector<1x256x64xbf16> to vector<256x64xbf16>
    %189 = vector.extract_strided_slice %4 {offsets = [5, 0], sizes = [1, 64], strides = [1, 1]} : vector<6x64xf32> to vector<1x64xf32>
    %190 = arith.truncf %186 : vector<8x256xf32> to vector<8x256xbf16>
    %cst_59 = arith.constant dense<0.000000e+00> : vector<8x64xf32>
    %191 = tpu.matmul %190, %188, %cst_59 {dimension_numbers = #tpu.dot_dimension_numbers<[1], [0], [0], [1], [0, 0, 1, 1], [], []>} : vector<8x256xbf16>, vector<256x64xbf16>, vector<8x64xf32> -> vector<8x64xf32>
    %192 = vector.broadcast %189 : vector<1x64xf32> to vector<8x64xf32>
    %193 = arith.addf %191, %192 : vector<8x64xf32>
    %194 = arith.addf %141, %193 : vector<8x64xf32>
    %c0_60 = arith.constant 0 : index
    %c0_61 = arith.constant 0 : index
    %195 = vector.load %arg16[%c0_60, %c0_61] : memref<8x64xf32, #tpu.memory_space<vmem>>, vector<8x64xf32>
    tpu.vector_store %arg16[%c0_60, %c0_61], %194 {strides = array<i32>} : memref<8x64xf32, #tpu.memory_space<vmem>>, vector<8x64xf32>,
    %c1_i32 = arith.constant 1 : i32
    %196 = arith.cmpi eq, %arg1, %c1_i32 : i32
    %197 = arith.extui %196 : i1 to i32
    %c0_i32_62 = arith.constant 0 : i32
    %198 = arith.cmpi ne, %197, %c0_i32_62 : i32
    scf.if %198 {
      %199 = vector.extract_strided_slice %194 {offsets = [0, 0], sizes = [1, 64], strides = [1, 1]} : vector<8x64xf32> to vector<1x64xf32>
      %c0_63 = arith.constant 0 : index
      %c0_64 = arith.constant 0 : index
      %200 = vector.load %arg13[%c0_63, %c0_64] : memref<2x64xf32, #tpu.memory_space<vmem>>, vector<1x64xf32>
      %c1 = arith.constant 1 : index
      %c0_65 = arith.constant 0 : index
      %201 = vector.load %arg13[%c1, %c0_65] : memref<2x64xf32, #tpu.memory_space<vmem>>, vector<1x64xf32>
      %cst_66 = arith.constant dense<0.000000e+00> : vector<1xf32>
      %202 = vector.multi_reduction <add>, %199, %cst_66 [1] : vector<1x64xf32> to vector<1xf32>
      %203 = vector.shape_cast %202 : vector<1xf32> to vector<1x1xf32>
      %cst_67 = arith.constant 6.400000e+01 : f32
      %204 = vector.broadcast %cst_67 : f32 to vector<1x1xf32>
      %205 = arith.divf %203, %204 : vector<1x1xf32>
      %206 = vector.broadcast %205 : vector<1x1xf32> to vector<1x64xf32>
      %207 = arith.subf %199, %206 : vector<1x64xf32>
      %208 = arith.mulf %207, %207 : vector<1x64xf32>
      %cst_68 = arith.constant dense<0.000000e+00> : vector<1xf32>
      %209 = vector.multi_reduction <add>, %208, %cst_68 [1] : vector<1x64xf32> to vector<1xf32>
      %210 = vector.shape_cast %209 : vector<1xf32> to vector<1x1xf32>
      %cst_69 = arith.constant 6.400000e+01 : f32
      %211 = vector.broadcast %cst_69 : f32 to vector<1x1xf32>
      %212 = arith.divf %210, %211 : vector<1x1xf32>
      %213 = vector.broadcast %205 : vector<1x1xf32> to vector<1x64xf32>
      %214 = arith.subf %199, %213 : vector<1x64xf32>
      %cst_70 = arith.constant 9.99999997E-7 : f32
      %215 = vector.broadcast %cst_70 : f32 to vector<1x1xf32>
      %216 = arith.addf %212, %215 : vector<1x1xf32>
      %217 = math.rsqrt %216 : vector<1x1xf32>
      %218 = vector.broadcast %217 : vector<1x1xf32> to vector<1x64xf32>
      %219 = arith.mulf %214, %218 : vector<1x64xf32>
      %220 = arith.mulf %219, %200 : vector<1x64xf32>
      %221 = arith.addf %220, %201 : vector<1x64xf32>
      %c0_71 = arith.constant 0 : index
      %c0_72 = arith.constant 0 : index
      %222 = vector.load %arg12[%c0_71, %c0_72] : memref<64x128xbf16, #tpu.memory_space<vmem>>, vector<64x128xbf16>
      %c0_73 = arith.constant 0 : index
      %c0_74 = arith.constant 0 : index
      %223 = vector.load %arg14[%c0_73, %c0_74] : memref<1x128xf32, #tpu.memory_space<vmem>>, vector<1x128xf32>
      %224 = arith.truncf %221 : vector<1x64xf32> to vector<1x64xbf16>
      %cst_75 = arith.constant dense<0.000000e+00> : vector<1x128xf32>
      %225 = tpu.matmul %224, %222, %cst_75 {dimension_numbers = #tpu.dot_dimension_numbers<[1], [0], [0], [1], [0, 0, 1, 1], [], []>} : vector<1x64xbf16>, vector<64x128xbf16>, vector<1x128xf32> -> vector<1x128xf32>
      %226 = arith.addf %225, %223 : vector<1x128xf32>
      %c0_76 = arith.constant 0 : index
      %c0_77 = arith.constant 0 : index
      %c0_78 = arith.constant 0 : index
      %227 = vector.load %arg15[%c0_76, %c0_77, %c0_78] : memref<1x1x128xf32, #tpu.memory_space<vmem>>, vector<1x1x128xf32>
      %228 = vector.shape_cast %227 : vector<1x1x128xf32> to vector<1x128xf32>
      %229 = vector.shape_cast %226 : vector<1x128xf32> to vector<1x1x128xf32>
      tpu.vector_store %arg15[%c0_76, %c0_77, %c0_78], %229 {strides = array<i32>} : memref<1x1x128xf32, #tpu.memory_space<vmem>>, vector<1x1x128xf32>,
    } else {
    }
    return
  }
  func.func @transform_0(%arg0: i32, %arg1: i32) -> (i32, i32, i32) {
    %c0_i32 = arith.constant 0 : i32
    %c0_i32_0 = arith.constant 0 : i32
    %c0_i32_1 = arith.constant 0 : i32
    return %arg0, %c0_i32, %c0_i32_0 : i32, i32, i32
  }
  func.func @transform_1(%arg0: i32, %arg1: i32) -> (i32, i32) {
    %c0_i32 = arith.constant 0 : i32
    %c0_i32_0 = arith.constant 0 : i32
    %c0_i32_1 = arith.constant 0 : i32
    return %c0_i32, %c0_i32_0 : i32, i32
  }
  func.func @transform_2(%arg0: i32, %arg1: i32) -> (i32, i32) {
    %c0_i32 = arith.constant 0 : i32
    %c0_i32_0 = arith.constant 0 : i32
    %c0_i32_1 = arith.constant 0 : i32
    return %c0_i32, %c0_i32_0 : i32, i32
  }
  func.func @transform_3(%arg0: i32, %arg1: i32) -> (i32, i32, i32) {
    %c0_i32 = arith.constant 0 : i32
    %c0_i32_0 = arith.constant 0 : i32
    %c0_i32_1 = arith.constant 0 : i32
    return %arg1, %c0_i32, %c0_i32_0 : i32, i32, i32
  }
  func.func @transform_4(%arg0: i32, %arg1: i32) -> (i32, i32, i32) {
    %c0_i32 = arith.constant 0 : i32
    %c0_i32_0 = arith.constant 0 : i32
    %c0_i32_1 = arith.constant 0 : i32
    return %arg1, %c0_i32, %c0_i32_0 : i32, i32, i32
  }
  func.func @transform_5(%arg0: i32, %arg1: i32) -> (i32, i32, i32) {
    %c0_i32 = arith.constant 0 : i32
    %c0_i32_0 = arith.constant 0 : i32
    %c0_i32_1 = arith.constant 0 : i32
    return %arg1, %c0_i32, %c0_i32_0 : i32, i32, i32
  }
  func.func @transform_6(%arg0: i32, %arg1: i32) -> (i32, i32, i32) {
    %c0_i32 = arith.constant 0 : i32
    %c0_i32_0 = arith.constant 0 : i32
    %c0_i32_1 = arith.constant 0 : i32
    return %arg1, %c0_i32, %c0_i32_0 : i32, i32, i32
  }
  func.func @transform_7(%arg0: i32, %arg1: i32) -> (i32, i32, i32) {
    %c0_i32 = arith.constant 0 : i32
    %c0_i32_0 = arith.constant 0 : i32
    %c0_i32_1 = arith.constant 0 : i32
    return %arg1, %c0_i32, %c0_i32_0 : i32, i32, i32
  }
  func.func @transform_8(%arg0: i32, %arg1: i32) -> (i32, i32, i32) {
    %c0_i32 = arith.constant 0 : i32
    %c0_i32_0 = arith.constant 0 : i32
    %c0_i32_1 = arith.constant 0 : i32
    return %arg1, %c0_i32, %c0_i32_0 : i32, i32, i32
  }
  func.func @transform_9(%arg0: i32, %arg1: i32) -> (i32, i32, i32) {
    %c0_i32 = arith.constant 0 : i32
    %c0_i32_0 = arith.constant 0 : i32
    %c0_i32_1 = arith.constant 0 : i32
    return %arg1, %c0_i32, %c0_i32_0 : i32, i32, i32
  }
  func.func @transform_10(%arg0: i32, %arg1: i32) -> (i32, i32) {
    %c0_i32 = arith.constant 0 : i32
    %c0_i32_0 = arith.constant 0 : i32
    %c0_i32_1 = arith.constant 0 : i32
    return %c0_i32, %c0_i32_0 : i32, i32
  }
  func.func @transform_11(%arg0: i32, %arg1: i32) -> (i32, i32) {
    %c0_i32 = arith.constant 0 : i32
    %c0_i32_0 = arith.constant 0 : i32
    %c0_i32_1 = arith.constant 0 : i32
    return %c0_i32, %c0_i32_0 : i32, i32
  }
  func.func @transform_12(%arg0: i32, %arg1: i32) -> (i32, i32) {
    %c0_i32 = arith.constant 0 : i32
    %c0_i32_0 = arith.constant 0 : i32
    %c0_i32_1 = arith.constant 0 : i32
    return %c0_i32, %c0_i32_0 : i32, i32
  }
  func.func @transform_13(%arg0: i32, %arg1: i32) -> (i32, i32, i32) {
    %c0_i32 = arith.constant 0 : i32
    %c0_i32_0 = arith.constant 0 : i32
    %c0_i32_1 = arith.constant 0 : i32
    return %arg0, %c0_i32, %c0_i32_0 : i32, i32, i32
  }
}

</mosaic_0001>

<llo_original>
// kernel: vit_forward.1
$region0: #{vit_forward.1}
  #allocation0 [shape = 'u32[]', space=smem, size = 0x4, offset = 0x4, fixed_abs, tag = 'smem constant byte address 0x4 - core index']
  #allocation1 [shape = 'u32[144,128]{1,0:T(1,128)}', space=vmem, size = 0x12000, scoped, tag = 'internal scratch']
  #allocation2 [shape = 'f32[8,64]{1,0:T(8,128)}', space=vmem, size = 0x1000, scoped, tag = 'scratch operand']
  %s0 = inlined_call_operand.vmem [shape: bf16[2,8,768], index: 0, kind: input, shape index: {}]
  %s1 = inlined_call_operand.vmem [shape: bf16[768,64], index: 1, kind: input, shape index: {}]
  %s2 = inlined_call_operand.vmem [shape: f32[8,64], index: 2, kind: input, shape index: {}]
  %s3 = inlined_call_operand.vmem [shape: bf16[2,64,192], index: 3, kind: input, shape index: {}]
  %s4 = inlined_call_operand.vmem [shape: f32[2,1,192], index: 4, kind: input, shape index: {}]
  %s5 = inlined_call_operand.vmem [shape: bf16[2,64,64], index: 5, kind: input, shape index: {}]
  %s6 = inlined_call_operand.vmem [shape: bf16[2,64,256], index: 6, kind: input, shape index: {}]
  %s7 = inlined_call_operand.vmem [shape: f32[2,1,256], index: 7, kind: input, shape index: {}]
  %s8 = inlined_call_operand.vmem [shape: bf16[2,256,64], index: 8, kind: input, shape index: {}]
  %s9 = inlined_call_operand.vmem [shape: f32[2,6,64], index: 9, kind: input, shape index: {}]
  %s10 = inlined_call_operand.vmem [shape: bf16[64,128], index: 10, kind: input, shape index: {}]
  %s11 = inlined_call_operand.vmem [shape: f32[2,64], index: 11, kind: input, shape index: {}]
  %s12 = inlined_call_operand.vmem [shape: f32[1,128], index: 12, kind: input, shape index: {}]
  %s13 = inlined_call_operand.hbm [shape: f32[2,1,128], index: 13, kind: output, shape index: {}]
  %s14 = sld [smem:[#allocation0]]
  $region93: #{vit_forward.1} parent=0
    _
  %s16 = ssub.s32 1, %s14
  %s17 = scalar_select 0, %s16, %s14
  $region1: #{vit_forward.1} parent=0
    #allocation3 [shape = 'u8[1024]{0}', space=vmem, size = 0x400, scoped, tag = 'output window, operand 0']
    #allocation4 [shape = 's32[2]{0}', space=sflag, size = 0x8, scoped, tag = 'scoped memory for vit_forward.1']
    %18 = vsyncpa [#allocation4], 0
    %s19 = scalar_lea.sflag [#allocation4], 1
    %20 = vsyncpa %s19, 0
    loop: start=0, step=1, limit=6
    $region2: #{vit_forward.1} parent=1 // loop_pre_header
      _
    $region3: #{vit_forward.1} parent=1 // loop_header
      %s22 = sphi 0, %s26
      %p23 = scmp.ge.s32.totalorder %s22, 6
      %s29 = sphi 0, %s41
      %s30 = sphi 0, %s37
      %s31 = sphi 0, %s29
      %s32 = sphi 0, %s30
      %s33 = sphi 0, %s31
      %s34 = sphi 0, %s32
      %s44 = sphi 0, %s46
      %s47 = sphi 0, %s44
      %s48 = sphi 0, %s47
      %s64 = sphi 0, %s48
      %s68 = sphi 0, %s68
      %s70 = sphi 0, %s68
      %s71 = sphi 0, %s70
      %s85 = sphi 0, %s71
      %s89 = sphi 0, %s89
      %s91 = sphi 0, %s89
      %s92 = sphi 0, %s91
      %s106 = sphi 0, %s92
      %s112 = sphi 0, %s114
      %s115 = sphi 0, %s112
      %s116 = sphi 0, %s115
      %s132 = sphi 0, %s116
      %s138 = sphi 0, %s140
      %s141 = sphi 0, %s138
      %s142 = sphi 0, %s141
      %s158 = sphi 0, %s142
      %s164 = sphi 0, %s166
      %s167 = sphi 0, %s164
      %s168 = sphi 0, %s167
      %s184 = sphi 0, %s168
      %s190 = sphi 0, %s192
      %s193 = sphi 0, %s190
      %s194 = sphi 0, %s193
      %s210 = sphi 0, %s194
      %s216 = sphi 0, %s218
      %s219 = sphi 0, %s216
      %s220 = sphi 0, %s219
      %s236 = sphi 0, %s220
      %s242 = sphi 0, %s244
      %s245 = sphi 0, %s242
      %s246 = sphi 0, %s245
      %s262 = sphi 0, %s246
      %s268 = sphi 0, %s270
      %s271 = sphi 0, %s268
      %s272 = sphi 0, %s271
      %s288 = sphi 0, %s272
      %s292 = sphi 0, %s292
      %s294 = sphi 0, %s292
      %s295 = sphi 0, %s294
      %s309 = sphi 0, %s295
      %s313 = sphi 0, %s313
      %s315 = sphi 0, %s313
      %s316 = sphi 0, %s315
      %s330 = sphi 0, %s316
      %s334 = sphi 0, %s334
      %s336 = sphi 0, %s334
      %s337 = sphi 0, %s336
      %s351 = sphi 0, %s337
      %s357 = sphi 0, %s359
      %s360 = sphi 0, %s357
      %s361 = sphi 0, %s360
      %s377 = sphi 0, %s361
    $region4: #{vit_forward.1} parent=1 // loop_header_branch
      %25 = sbr.rel (%p23) target = $region8
    $region5: #{vit_forward.1} parent=1 // loop_body
      %s27 = ssub.s32 %s22, 1
      %s28 = ssub.s32 %s22, 2
      %s35 = sadd.s32 1, %s30
      %p36 = scmp.ge.s32.totalorder %s35, 2
      %s37 = scalar_select %p36, 0, %s35
      %s38 = sadd.s32 1, %s29
      %s39 = scalar_select %p36, %s38, %s29
      %p40 = scmp.ge.s32.totalorder %s39, 2
      %s41 = scalar_select %p40, 0, %s39
      %s42 = ssub.s32 %s29, %s41
      %p43 = scmp.eq.s32.totalorder %s42, 0
      %s45 = sadd.s32 %s44, 1
      %s46 = scalar_select %p43, %s44, %s45
      %p49 = pneg %p43
      %p50 = scmp.eq.s32.totalorder %s22, 3
      %p51 = por %p49, %p50
      %p52 = scmp.ne.s32.totalorder %s44, %s47
      %p53 = scmp.eq.s32.totalorder %s22, 0
      %p54 = por %p52, %p53
      %p55 = scmp.ne.s32.totalorder %s44, %s47
      %p56 = scmp.eq.s32.totalorder %s27, 3
      %p57 = por %p55, %p56
      %p58 = scmp.ne.s32.totalorder %s47, %s48
      %p59 = scmp.eq.s32.totalorder %s27, 0
      %p60 = por %p58, %p59
      %p61 = scmp.ne.s32.totalorder %s47, %s48
      %p62 = scmp.eq.s32.totalorder %s28, 3
      %p63 = por %p61, %p62
      %p65 = scmp.ne.s32.totalorder %s48, %s64
      %p66 = scmp.eq.s32.totalorder %s28, 0
      %p67 = por %p65, %p66
      %s69 = sadd.s32 %s68, 1
      %p72 = scmp.eq.s32.totalorder %s22, 3
      %p73 = scmp.ne.s32.totalorder %s68, %s70
      %p74 = scmp.eq.s32.totalorder %s22, 0
      %p75 = por %p73, %p74
      %p76 = scmp.ne.s32.totalorder %s68, %s70
      %p77 = scmp.eq.s32.totalorder %s27, 3
      %p78 = por %p76, %p77
      %p79 = scmp.ne.s32.totalorder %s70, %s71
      %p80 = scmp.eq.s32.totalorder %s27, 0
      %p81 = por %p79, %p80
      %p82 = scmp.ne.s32.totalorder %s70, %s71
      %p83 = scmp.eq.s32.totalorder %s28, 3
      %p84 = por %p82, %p83
      %p86 = scmp.ne.s32.totalorder %s71, %s85
      %p87 = scmp.eq.s32.totalorder %s28, 0
      %p88 = por %p86, %p87
      %s90 = sadd.s32 %s89, 1
      %p93 = scmp.eq.s32.totalorder %s22, 3
      %p94 = scmp.ne.s32.totalorder %s89, %s91
      %p95 = scmp.eq.s32.totalorder %s22, 0
      %p96 = por %p94, %p95
      %p97 = scmp.ne.s32.totalorder %s89, %s91
      %p98 = scmp.eq.s32.totalorder %s27, 3
      %p99 = por %p97, %p98
      %p100 = scmp.ne.s32.totalorder %s91, %s92
      %p101 = scmp.eq.s32.totalorder %s27, 0
      %p102 = por %p100, %p101
      %p103 = scmp.ne.s32.totalorder %s91, %s92
      %p104 = scmp.eq.s32.totalorder %s28, 3
      %p105 = por %p103, %p104
      %p107 = scmp.ne.s32.totalorder %s92, %s106
      %p108 = scmp.eq.s32.totalorder %s28, 0
      %p109 = por %p107, %p108
      %s110 = ssub.s32 %s30, %s37
      %p111 = scmp.eq.s32.totalorder %s110, 0
      %s113 = sadd.s32 %s112, 1
      %s114 = scalar_select %p111, %s112, %s113
      %p117 = pneg %p111
      %p118 = scmp.eq.s32.totalorder %s22, 3
      %p119 = por %p117, %p118
      %p120 = scmp.ne.s32.totalorder %s112, %s115
      %p121 = scmp.eq.s32.totalorder %s22, 0
      %p122 = por %p120, %p121
      %p123 = scmp.ne.s32.totalorder %s112, %s115
      %p124 = scmp.eq.s32.totalorder %s27, 3
      %p125 = por %p123, %p124
      %p126 = scmp.ne.s32.totalorder %s115, %s116
      %p127 = scmp.eq.s32.totalorder %s27, 0
      %p128 = por %p126, %p127
      %p129 = scmp.ne.s32.totalorder %s115, %s116
      %p130 = scmp.eq.s32.totalorder %s28, 3
      %p131 = por %p129, %p130
      %p133 = scmp.ne.s32.totalorder %s116, %s132
      %p134 = scmp.eq.s32.totalorder %s28, 0
      %p135 = por %p133, %p134
      %s136 = ssub.s32 %s30, %s37
      %p137 = scmp.eq.s32.totalorder %s136, 0
      %s139 = sadd.s32 %s138, 1
      %s140 = scalar_select %p137, %s138, %s139
      %p143 = pneg %p137
      %p144 = scmp.eq.s32.totalorder %s22, 3
      %p145 = por %p143, %p144
      %p146 = scmp.ne.s32.totalorder %s138, %s141
      %p147 = scmp.eq.s32.totalorder %s22, 0
      %p148 = por %p146, %p147
      %p149 = scmp.ne.s32.totalorder %s138, %s141
      %p150 = scmp.eq.s32.totalorder %s27, 3
      %p151 = por %p149, %p150
      %p152 = scmp.ne.s32.totalorder %s141, %s142
      %p153 = scmp.eq.s32.totalorder %s27, 0
      %p154 = por %p152, %p153
      %p155 = scmp.ne.s32.totalorder %s141, %s142
      %p156 = scmp.eq.s32.totalorder %s28, 3
      %p157 = por %p155, %p156
      %p159 = scmp.ne.s32.totalorder %s142, %s158
      %p160 = scmp.eq.s32.totalorder %s28, 0
      %p161 = por %p159, %p160
      %s162 = ssub.s32 %s30, %s37
      %p163 = scmp.eq.s32.totalorder %s162, 0
      %s165 = sadd.s32 %s164, 1
      %s166 = scalar_select %p163, %s164, %s165
      %p169 = pneg %p163
      %p170 = scmp.eq.s32.totalorder %s22, 3
      %p171 = por %p169, %p170
      %p172 = scmp.ne.s32.totalorder %s164, %s167
      %p173 = scmp.eq.s32.totalorder %s22, 0
      %p174 = por %p172, %p173
      %p175 = scmp.ne.s32.totalorder %s164, %s167
      %p176 = scmp.eq.s32.totalorder %s27, 3
      %p177 = por %p175, %p176
      %p178 = scmp.ne.s32.totalorder %s167, %s168
      %p179 = scmp.eq.s32.totalorder %s27, 0
      %p180 = por %p178, %p179
      %p181 = scmp.ne.s32.totalorder %s167, %s168
      %p182 = scmp.eq.s32.totalorder %s28, 3
      %p183 = por %p181, %p182
      %p185 = scmp.ne.s32.totalorder %s168, %s184
      %p186 = scmp.eq.s32.totalorder %s28, 0
      %p187 = por %p185, %p186
      %s188 = ssub.s32 %s30, %s37
      %p189 = scmp.eq.s32.totalorder %s188, 0
      %s191 = sadd.s32 %s190, 1
      %s192 = scalar_select %p189, %s190, %s191
      %p195 = pneg %p189
      %p196 = scmp.eq.s32.totalorder %s22, 3
      %p197 = por %p195, %p196
      %p198 = scmp.ne.s32.totalorder %s190, %s193
      %p199 = scmp.eq.s32.totalorder %s22, 0
      %p200 = por %p198, %p199
      %p201 = scmp.ne.s32.totalorder %s190, %s193
      %p202 = scmp.eq.s32.totalorder %s27, 3
      %p203 = por %p201, %p202
      %p204 = scmp.ne.s32.totalorder %s193, %s194
      %p205 = scmp.eq.s32.totalorder %s27, 0
      %p206 = por %p204, %p205
      %p207 = scmp.ne.s32.totalorder %s193, %s194
      %p208 = scmp.eq.s32.totalorder %s28, 3
      %p209 = por %p207, %p208
      %p211 = scmp.ne.s32.totalorder %s194, %s210
      %p212 = scmp.eq.s32.totalorder %s28, 0
      %p213 = por %p211, %p212
      %s214 = ssub.s32 %s30, %s37
      %p215 = scmp.eq.s32.totalorder %s214, 0
      %s217 = sadd.s32 %s216, 1
      %s218 = scalar_select %p215, %s216, %s217
      %p221 = pneg %p215
      %p222 = scmp.eq.s32.totalorder %s22, 3
      %p223 = por %p221, %p222
      %p224 = scmp.ne.s32.totalorder %s216, %s219
      %p225 = scmp.eq.s32.totalorder %s22, 0
      %p226 = por %p224, %p225
      %p227 = scmp.ne.s32.totalorder %s216, %s219
      %p228 = scmp.eq.s32.totalorder %s27, 3
      %p229 = por %p227, %p228
      %p230 = scmp.ne.s32.totalorder %s219, %s220
      %p231 = scmp.eq.s32.totalorder %s27, 0
      %p232 = por %p230, %p231
      %p233 = scmp.ne.s32.totalorder %s219, %s220
      %p234 = scmp.eq.s32.totalorder %s28, 3
      %p235 = por %p233, %p234
      %p237 = scmp.ne.s32.totalorder %s220, %s236
      %p238 = scmp.eq.s32.totalorder %s28, 0
      %p239 = por %p237, %p238
      %s240 = ssub.s32 %s30, %s37
      %p241 = scmp.eq.s32.totalorder %s240, 0
      %s243 = sadd.s32 %s242, 1
      %s244 = scalar_select %p241, %s242, %s243
      %p247 = pneg %p241
      %p248 = scmp.eq.s32.totalorder %s22, 3
      %p249 = por %p247, %p248
      %p250 = scmp.ne.s32.totalorder %s242, %s245
      %p251 = scmp.eq.s32.totalorder %s22, 0
      %p252 = por %p250, %p251
      %p253 = scmp.ne.s32.totalorder %s242, %s245
      %p254 = scmp.eq.s32.totalorder %s27, 3
      %p255 = por %p253, %p254
      %p256 = scmp.ne.s32.totalorder %s245, %s246
      %p257 = scmp.eq.s32.totalorder %s27, 0
      %p258 = por %p256, %p257
      %p259 = scmp.ne.s32.totalorder %s245, %s246
      %p260 = scmp.eq.s32.totalorder %s28, 3
      %p261 = por %p259, %p260
      %p263 = scmp.ne.s32.totalorder %s246, %s262
      %p264 = scmp.eq.s32.totalorder %s28, 0
      %p265 = por %p263, %p264
      %s266 = ssub.s32 %s30, %s37
      %p267 = scmp.eq.s32.totalorder %s266, 0
      %s269 = sadd.s32 %s268, 1
      %s270 = scalar_select %p267, %s268, %s269
      %p273 = pneg %p267
      %p274 = scmp.eq.s32.totalorder %s22, 3
      %p275 = por %p273, %p274
      %p276 = scmp.ne.s32.totalorder %s268, %s271
      %p277 = scmp.eq.s32.totalorder %s22, 0
      %p278 = por %p276, %p277
      %p279 = scmp.ne.s32.totalorder %s268, %s271
      %p280 = scmp.eq.s32.totalorder %s27, 3
      %p281 = por %p279, %p280
      %p282 = scmp.ne.s32.totalorder %s271, %s272
      %p283 = scmp.eq.s32.totalorder %s27, 0
      %p284 = por %p282, %p283
      %p285 = scmp.ne.s32.totalorder %s271, %s272
      %p286 = scmp.eq.s32.totalorder %s28, 3
      %p287 = por %p285, %p286
      %p289 = scmp.ne.s32.totalorder %s272, %s288
      %p290 = scmp.eq.s32.totalorder %s28, 0
      %p291 = por %p289, %p290
      %s293 = sadd.s32 %s292, 1
      %p296 = scmp.eq.s32.totalorder %s22, 3
      %p297 = scmp.ne.s32.totalorder %s292, %s294
      %p298 = scmp.eq.s32.totalorder %s22, 0
      %p299 = por %p297, %p298
      %p300 = scmp.ne.s32.totalorder %s292, %s294
      %p301 = scmp.eq.s32.totalorder %s27, 3
      %p302 = por %p300, %p301
      %p303 = scmp.ne.s32.totalorder %s294, %s295
      %p304 = scmp.eq.s32.totalorder %s27, 0
      %p305 = por %p303, %p304
      %p306 = scmp.ne.s32.totalorder %s294, %s295
      %p307 = scmp.eq.s32.totalorder %s28, 3
      %p308 = por %p306, %p307
      %p310 = scmp.ne.s32.totalorder %s295, %s309
      %p311 = scmp.eq.s32.totalorder %s28, 0
      %p312 = por %p310, %p311
      %s314 = sadd.s32 %s313, 1
      %p317 = scmp.eq.s32.totalorder %s22, 3
      %p318 = scmp.ne.s32.totalorder %s313, %s315
      %p319 = scmp.eq.s32.totalorder %s22, 0
      %p320 = por %p318, %p319
      %p321 = scmp.ne.s32.totalorder %s313, %s315
      %p322 = scmp.eq.s32.totalorder %s27, 3
      %p323 = por %p321, %p322
      %p324 = scmp.ne.s32.totalorder %s315, %s316
      %p325 = scmp.eq.s32.totalorder %s27, 0
      %p326 = por %p324, %p325
      %p327 = scmp.ne.s32.totalorder %s315, %s316
      %p328 = scmp.eq.s32.totalorder %s28, 3
      %p329 = por %p327, %p328
      %p331 = scmp.ne.s32.totalorder %s316, %s330
      %p332 = scmp.eq.s32.totalorder %s28, 0
      %p333 = por %p331, %p332
      %s335 = sadd.s32 %s334, 1
      %p338 = scmp.eq.s32.totalorder %s22, 3
      %p339 = scmp.ne.s32.totalorder %s334, %s336
      %p340 = scmp.eq.s32.totalorder %s22, 0
      %p341 = por %p339, %p340
      %p342 = scmp.ne.s32.totalorder %s334, %s336
      %p343 = scmp.eq.s32.totalorder %s27, 3
      %p344 = por %p342, %p343
      %p345 = scmp.ne.s32.totalorder %s336, %s337
      %p346 = scmp.eq.s32.totalorder %s27, 0
      %p347 = por %p345, %p346
      %p348 = scmp.ne.s32.totalorder %s336, %s337
      %p349 = scmp.eq.s32.totalorder %s28, 3
      %p350 = por %p348, %p349
      %p352 = scmp.ne.s32.totalorder %s337, %s351
      %p353 = scmp.eq.s32.totalorder %s28, 0
      %p354 = por %p352, %p353
      %s355 = ssub.s32 %s29, %s41
      %p356 = scmp.eq.s32.totalorder %s355, 0
      %s358 = sadd.s32 %s357, 1
      %s359 = scalar_select %p356, %s357, %s358
      %p362 = pneg %p356
      %p363 = scmp.eq.s32.totalorder %s22, 3
      %p364 = por %p362, %p363
      %p365 = scmp.ne.s32.totalorder %s357, %s360
      %p366 = scmp.eq.s32.totalorder %s22, 0
      %p367 = por %p365, %p366
      %p368 = scmp.ne.s32.totalorder %s357, %s360
      %p369 = scmp.eq.s32.totalorder %s27, 3
      %p370 = por %p368, %p369
      %p371 = scmp.ne.s32.totalorder %s360, %s361
      %p372 = scmp.eq.s32.totalorder %s27, 0
      %p373 = por %p371, %p372
      %p374 = scmp.ne.s32.totalorder %s360, %s361
      %p375 = scmp.eq.s32.totalorder %s28, 3
      %p376 = por %p374, %p375
      %p378 = scmp.ne.s32.totalorder %s361, %s377
      %p379 = scmp.eq.s32.totalorder %s28, 0
      %p380 = por %p378, %p379
      %p381 = scmp.le.s32.totalorder 1, %s22
      %p382 = scmp.lt.s32.totalorder %s22, 5
      %p383 = pnand %p381, %p382
      %p384 = pneg %p383
      // Predicated region
      $region9: #{vit_forward.1} parent=5 // pred_check
        _
      $region10: #{vit_forward.1} parent=5 // pred_check_branch
        %386 = sbr.rel (%p383) target = $region12
      $region11: #{vit_forward.1} parent=5 // pred_region
        %s387 = ssub.s32 %s22, 1
        // Predicated region
        $region13: #{vit_forward.1} parent=11 // pred_check
          %p388 = pneg %p81
        $region14: #{vit_forward.1} parent=11 // pred_check_branch
          %390 = sbr.rel (%p388) target = $region16
        $region15: #{vit_forward.1} parent=11 // pred_region
          _
        $region16: #{vit_forward.1} parent=11 // pred_fallthru
          _
        // Predicated region
        $region17: #{vit_forward.1} parent=11 // pred_check
          %p391 = pneg %p102
        $region18: #{vit_forward.1} parent=11 // pred_check_branch
          %393 = sbr.rel (%p391) target = $region20
        $region19: #{vit_forward.1} parent=11 // pred_region
          _
        $region20: #{vit_forward.1} parent=11 // pred_fallthru
          _
        // Predicated region
        $region21: #{vit_forward.1} parent=11 // pred_check
          %p394 = pneg %p305
        $region22: #{vit_forward.1} parent=11 // pred_check_branch
          %396 = sbr.rel (%p394) target = $region24
        $region23: #{vit_forward.1} parent=11 // pred_region
          _
        $region24: #{vit_forward.1} parent=11 // pred_fallthru
          _
        // Predicated region
        $region25: #{vit_forward.1} parent=11 // pred_check
          %p397 = pneg %p326
        $region26: #{vit_forward.1} parent=11 // pred_check_branch
          %399 = sbr.rel (%p397) target = $region28
        $region27: #{vit_forward.1} parent=11 // pred_region
          _
        $region28: #{vit_forward.1} parent=11 // pred_fallthru
          _
        // Predicated region
        $region29: #{vit_forward.1} parent=11 // pred_check
          %p400 = pneg %p347
        $region30: #{vit_forward.1} parent=11 // pred_check_branch
          %402 = sbr.rel (%p400) target = $region32
        $region31: #{vit_forward.1} parent=11 // pred_region
          _
        $region32: #{vit_forward.1} parent=11 // pred_fallthru
          _
      $region12: #{vit_forward.1} parent=5 // pred_fallthru
        _
      %p403 = scmp.lt.s32.totalorder %s22, 4
      // Predicated region
      $region33: #{vit_forward.1} parent=5 // pred_check
        %p404 = pneg %p403
      $region34: #{vit_forward.1} parent=5 // pred_check_branch
        %406 = sbr.rel (%p404) target = $region36
      $region35: #{vit_forward.1} parent=5 // pred_region
        // Predicated region
        $region37: #{vit_forward.1} parent=35 // pred_check
          %p407 = pneg %p54
        $region38: #{vit_forward.1} parent=35 // pred_check_branch
          %409 = sbr.rel (%p407) target = $region40
        $region39: #{vit_forward.1} parent=35 // pred_region
          %p410 = scmp.lt.s32.totalorder %s29, 1
          %s411 = scalar_select %p410, %s29, 1
          %s412 = smul.addr %s411, 6
          %s413 = smul.addr %s412, 4
          %s414 = scalar_lea.vmem %s0, %s413
        $region40: #{vit_forward.1} parent=35 // pred_fallthru
          _
        // Predicated region
        $region41: #{vit_forward.1} parent=35 // pred_check
          %p415 = pneg %p122
        $region42: #{vit_forward.1} parent=35 // pred_check_branch
          %417 = sbr.rel (%p415) target = $region44
        $region43: #{vit_forward.1} parent=35 // pred_region
          %p418 = scmp.lt.s32.totalorder %s30, 1
          %s419 = scalar_select %p418, %s30, 1
          %s420 = smul.addr %s419, 16
          %s421 = smul.addr %s420, 4
          %s422 = scalar_lea.vmem %s3, %s421
        $region44: #{vit_forward.1} parent=35 // pred_fallthru
          _
        // Predicated region
        $region45: #{vit_forward.1} parent=35 // pred_check
          %p423 = pneg %p148
        $region46: #{vit_forward.1} parent=35 // pred_check_branch
          %425 = sbr.rel (%p423) target = $region48
        $region47: #{vit_forward.1} parent=35 // pred_region
          %p426 = scmp.lt.s32.totalorder %s30, 1
          %s427 = scalar_select %p426, %s30, 1
          %s428 = smul.addr %s427, 2
          %s429 = scalar_lea.vmem %s4, %s428
        $region48: #{vit_forward.1} parent=35 // pred_fallthru
          _
        // Predicated region
        $region49: #{vit_forward.1} parent=35 // pred_check
          %p430 = pneg %p174
        $region50: #{vit_forward.1} parent=35 // pred_check_branch
          %432 = sbr.rel (%p430) target = $region52
        $region51: #{vit_forward.1} parent=35 // pred_region
          %p433 = scmp.lt.s32.totalorder %s30, 1
          %s434 = scalar_select %p433, %s30, 1
          %s435 = smul.addr %s434, 8
          %s436 = smul.addr %s435, 4
          %s437 = scalar_lea.vmem %s5, %s436
        $region52: #{vit_forward.1} parent=35 // pred_fallthru
          _
        // Predicated region
        $region53: #{vit_forward.1} parent=35 // pred_check
          %p438 = pneg %p200
        $region54: #{vit_forward.1} parent=35 // pred_check_branch
          %440 = sbr.rel (%p438) target = $region56
        $region55: #{vit_forward.1} parent=35 // pred_region
          %p441 = scmp.lt.s32.totalorder %s30, 1
          %s442 = scalar_select %p441, %s30, 1
          %s443 = smul.addr %s442, 16
          %s444 = smul.addr %s443, 4
          %s445 = scalar_lea.vmem %s6, %s444
        $region56: #{vit_forward.1} parent=35 // pred_fallthru
          _
        // Predicated region
        $region57: #{vit_forward.1} parent=35 // pred_check
          %p446 = pneg %p226
        $region58: #{vit_forward.1} parent=35 // pred_check_branch
          %448 = sbr.rel (%p446) target = $region60
        $region59: #{vit_forward.1} parent=35 // pred_region
          %p449 = scmp.lt.s32.totalorder %s30, 1
          %s450 = scalar_select %p449, %s30, 1
          %s451 = smul.addr %s450, 2
          %s452 = scalar_lea.vmem %s7, %s451
        $region60: #{vit_forward.1} parent=35 // pred_fallthru
          _
        // Predicated region
        $region61: #{vit_forward.1} parent=35 // pred_check
          %p453 = pneg %p252
        $region62: #{vit_forward.1} parent=35 // pred_check_branch
          %455 = sbr.rel (%p453) target = $region64
        $region63: #{vit_forward.1} parent=35 // pred_region
          %p456 = scmp.lt.s32.totalorder %s30, 1
          %s457 = scalar_select %p456, %s30, 1
          %s458 = smul.addr %s457, 32
          %s459 = smul.addr %s458, 4
          %s460 = scalar_lea.vmem %s8, %s459
        $region64: #{vit_forward.1} parent=35 // pred_fallthru
          _
        // Predicated region
        $region65: #{vit_forward.1} parent=35 // pred_check
          %p461 = pneg %p278
        $region66: #{vit_forward.1} parent=35 // pred_check_branch
          %463 = sbr.rel (%p461) target = $region68
        $region67: #{vit_forward.1} parent=35 // pred_region
          %p464 = scmp.lt.s32.totalorder %s30, 1
          %s465 = scalar_select %p464, %s30, 1
          %s466 = smul.addr %s465, 8
          %s467 = scalar_lea.vmem %s9, %s466
        $region68: #{vit_forward.1} parent=35 // pred_fallthru
          _
      $region36: #{vit_forward.1} parent=5 // pred_fallthru
        _
      %p468 = scmp.le.s32.totalorder 1, %s22
      %p469 = scmp.lt.s32.totalorder %s22, 5
      %p470 = pnand %p468, %p469
      %p471 = pneg %p470
      // Predicated region
      $region69: #{vit_forward.1} parent=5 // pred_check
        _
      $region70: #{vit_forward.1} parent=5 // pred_check_branch
        %473 = sbr.rel (%p470) target = $region72
      $region71: #{vit_forward.1} parent=5 // pred_region
        %s474 = ssub.s32 %s22, 1
        %p475 = scmp.lt.s32.totalorder %s31, 1
        %s476 = scalar_select %p475, %s31, 1
        %s477 = smul.addr %s476, 6
        %s478 = smul.addr %s477, 4
        %s479 = scalar_lea.vmem %s0, %s478
        %p480 = pneg %p60
        %p481 = pneg %p57
        %p482 = pneg %p81
        %p483 = pneg %p78
        %p484 = pneg %p102
        %p485 = pneg %p99
        %p486 = scmp.lt.s32.totalorder %s32, 1
        %s487 = scalar_select %p486, %s32, 1
        %s488 = smul.addr %s487, 16
        %s489 = smul.addr %s488, 4
        %s490 = scalar_lea.vmem %s3, %s489
        %p491 = pneg %p128
        %p492 = pneg %p125
        %p493 = scmp.lt.s32.totalorder %s32, 1
        %s494 = scalar_select %p493, %s32, 1
        %s495 = smul.addr %s494, 2
        %s496 = scalar_lea.vmem %s4, %s495
        %p497 = pneg %p154
        %p498 = pneg %p151
        %p499 = scmp.lt.s32.totalorder %s32, 1
        %s500 = scalar_select %p499, %s32, 1
        %s501 = smul.addr %s500, 8
        %s502 = smul.addr %s501, 4
        %s503 = scalar_lea.vmem %s5, %s502
        %p504 = pneg %p180
        %p505 = pneg %p177
        %p506 = scmp.lt.s32.totalorder %s32, 1
        %s507 = scalar_select %p506, %s32, 1
        %s508 = smul.addr %s507, 16
        %s509 = smul.addr %s508, 4
        %s510 = scalar_lea.vmem %s6, %s509
        %p511 = pneg %p206
        %p512 = pneg %p203
        %p513 = scmp.lt.s32.totalorder %s32, 1
        %s514 = scalar_select %p513, %s32, 1
        %s515 = smul.addr %s514, 2
        %s516 = scalar_lea.vmem %s7, %s515
        %p517 = pneg %p232
        %p518 = pneg %p229
        %p519 = scmp.lt.s32.totalorder %s32, 1
        %s520 = scalar_select %p519, %s32, 1
        %s521 = smul.addr %s520, 32
        %s522 = smul.addr %s521, 4
        %s523 = scalar_lea.vmem %s8, %s522
        %p524 = pneg %p258
        %p525 = pneg %p255
        %p526 = scmp.lt.s32.totalorder %s32, 1
        %s527 = scalar_select %p526, %s32, 1
        %s528 = smul.addr %s527, 8
        %s529 = scalar_lea.vmem %s9, %s528
        %p530 = pneg %p284
        %p531 = pneg %p281
        %p532 = pneg %p305
        %p533 = pneg %p302
        %p534 = pneg %p326
        %p535 = pneg %p323
        %p536 = pneg %p347
        %p537 = pneg %p344
        %p538 = pneg %p373
        %p539 = pneg %p370
        %s540 = sand.u32 %s360, 1
        %s541 = scalar_lea.sflag [#allocation4], %s540
        %s542 = sand.u32 %s360, 1
        %s543 = scalar_lea.vmem [#allocation3], %s542
        %p544 = scmp.lt.s32.totalorder %s31, 1
        %s545 = scalar_select %p544, %s31, 1
        %s546 = smul.addr %s545, 6
        %s547 = smul.addr %s546, 4
        %s548 = scalar_lea.vmem %s0, %s547
        %p549 = scmp.lt.s32.totalorder %s32, 1
        %s550 = scalar_select %p549, %s32, 1
        %s551 = smul.addr %s550, 16
        %s552 = smul.addr %s551, 4
        %s553 = scalar_lea.vmem %s3, %s552
        %p554 = scmp.lt.s32.totalorder %s32, 1
        %s555 = scalar_select %p554, %s32, 1
        %s556 = smul.addr %s555, 2
        %s557 = scalar_lea.vmem %s4, %s556
        %p558 = scmp.lt.s32.totalorder %s32, 1
        %s559 = scalar_select %p558, %s32, 1
        %s560 = smul.addr %s559, 8
        %s561 = smul.addr %s560, 4
        %s562 = scalar_lea.vmem %s5, %s561
        %p563 = scmp.lt.s32.totalorder %s32, 1
        %s564 = scalar_select %p563, %s32, 1
        %s565 = smul.addr %s564, 16
        %s566 = smul.addr %s565, 4
        %s567 = scalar_lea.vmem %s6, %s566
        %p568 = scmp.lt.s32.totalorder %s32, 1
        %s569 = scalar_select %p568, %s32, 1
        %s570 = smul.addr %s569, 2
        %s571 = scalar_lea.vmem %s7, %s570
        %p572 = scmp.lt.s32.totalorder %s32, 1
        %s573 = scalar_select %p572, %s32, 1
        %s574 = smul.addr %s573, 32
        %s575 = smul.addr %s574, 4
        %s576 = scalar_lea.vmem %s8, %s575
        %p577 = scmp.lt.s32.totalorder %s32, 1
        %s578 = scalar_select %p577, %s32, 1
        %s579 = smul.addr %s578, 8
        %s580 = scalar_lea.vmem %s9, %s579
        %p582 = scmp.eq.s32.totalorder %s32, 0
        // Predicated region
        $region73: #{vit_forward.1} parent=71 // pred_check
          %p583 = pneg %p582
        $region74: #{vit_forward.1} parent=71 // pred_check_branch
          %585 = sbr.rel (%p583) target = $region76
        $region75: #{vit_forward.1} parent=71 // pred_region
          %v586 = vld [vmem:[%s548] sm:$0xff]
          %v587 = vld [vmem:[%s548 + $0x8] sm:$0xff]
          %v588 = vld [vmem:[%s548 + $0x10] sm:$0xff]
          %v589 = vld [vmem:[%s1] sm:$0xf]
          %v590 = vld [vmem:[%s1 + $0x4] sm:$0xf]
          %v591 = vld [vmem:[%s1 + $0x8] sm:$0xf]
          %v592 = vld [vmem:[%s1 + $0xc] sm:$0xf]
          %v593 = vld [vmem:[%s1 + $0x10] sm:$0xf]
          %v594 = vld [vmem:[%s1 + $0x14] sm:$0xf]
          %v595 = vld [vmem:[%s1 + $0x18] sm:$0xf]
          %v596 = vld [vmem:[%s1 + $0x1c] sm:$0xf]
          %v597 = vld [vmem:[%s1 + $0x20] sm:$0xf]
          %v598 = vld [vmem:[%s1 + $0x24] sm:$0xf]
          %v599 = vld [vmem:[%s1 + $0x28] sm:$0xf]
          %v600 = vld [vmem:[%s1 + $0x2c] sm:$0xf]
          %v601 = vld [vmem:[%s1 + $0x30] sm:$0xf]
          %v602 = vld [vmem:[%s1 + $0x34] sm:$0xf]
          %v603 = vld [vmem:[%s1 + $0x38] sm:$0xf]
          %v604 = vld [vmem:[%s1 + $0x3c] sm:$0xf]
          %v605 = vld [vmem:[%s1 + $0x40] sm:$0xf]
          %v606 = vld [vmem:[%s1 + $0x44] sm:$0xf]
          %v607 = vld [vmem:[%s1 + $0x48] sm:$0xf]
          %v608 = vld [vmem:[%s1 + $0x4c] sm:$0xf]
          %v609 = vld [vmem:[%s1 + $0x50] sm:$0xf]
          %v610 = vld [vmem:[%s1 + $0x54] sm:$0xf]
          %v611 = vld [vmem:[%s1 + $0x58] sm:$0xf]
          %v612 = vld [vmem:[%s1 + $0x5c] sm:$0xf]
          %v613 = vld [vmem:[%s1 + $0x60] sm:$0xf]
          %v614 = vld [vmem:[%s1 + $0x64] sm:$0xf]
          %v615 = vld [vmem:[%s1 + $0x68] sm:$0xf]
          %v616 = vld [vmem:[%s1 + $0x6c] sm:$0xf]
          %v617 = vld [vmem:[%s1 + $0x70] sm:$0xf]
          %v618 = vld [vmem:[%s1 + $0x74] sm:$0xf]
          %v619 = vld [vmem:[%s1 + $0x78] sm:$0xf]
          %v620 = vld [vmem:[%s1 + $0x7c] sm:$0xf]
          %v621 = vld [vmem:[%s1 + $0x80] sm:$0xf]
          %v622 = vld [vmem:[%s1 + $0x84] sm:$0xf]
          %v623 = vld [vmem:[%s1 + $0x88] sm:$0xf]
          %v624 = vld [vmem:[%s1 + $0x8c] sm:$0xf]
          %v625 = vld [vmem:[%s1 + $0x90] sm:$0xf]
          %v626 = vld [vmem:[%s1 + $0x94] sm:$0xf]
          %v627 = vld [vmem:[%s1 + $0x98] sm:$0xf]
          %v628 = vld [vmem:[%s1 + $0x9c] sm:$0xf]
          %v629 = vld [vmem:[%s1 + $0xa0] sm:$0xf]
          %v630 = vld [vmem:[%s1 + $0xa4] sm:$0xf]
          %v631 = vld [vmem:[%s1 + $0xa8] sm:$0xf]
          %v632 = vld [vmem:[%s1 + $0xac] sm:$0xf]
          %v633 = vld [vmem:[%s1 + $0xb0] sm:$0xf]
          %v634 = vld [vmem:[%s1 + $0xb4] sm:$0xf]
          %v635 = vld [vmem:[%s1 + $0xb8] sm:$0xf]
          %v636 = vld [vmem:[%s1 + $0xbc] sm:$0xf]
          %v637 = vld [vmem:[%s1 + $0xc0] sm:$0xf]
          %v638 = vld [vmem:[%s1 + $0xc4] sm:$0xf]
          %v639 = vld [vmem:[%s1 + $0xc8] sm:$0xf]
          %v640 = vld [vmem:[%s1 + $0xcc] sm:$0xf]
          %v641 = vld [vmem:[%s1 + $0xd0] sm:$0xf]
          %v642 = vld [vmem:[%s1 + $0xd4] sm:$0xf]
          %v643 = vld [vmem:[%s1 + $0xd8] sm:$0xf]
          %v644 = vld [vmem:[%s1 + $0xdc] sm:$0xf]
          %v645 = vld [vmem:[%s1 + $0xe0] sm:$0xf]
          %v646 = vld [vmem:[%s1 + $0xe4] sm:$0xf]
          %v647 = vld [vmem:[%s1 + $0xe8] sm:$0xf]
          %v648 = vld [vmem:[%s1 + $0xec] sm:$0xf]
          %v649 = vld [vmem:[%s1 + $0xf0] sm:$0xf]
          %v650 = vld [vmem:[%s1 + $0xf4] sm:$0xf]
          %v651 = vld [vmem:[%s1 + $0xf8] sm:$0xf]
          %v652 = vld [vmem:[%s1 + $0xfc] sm:$0xf]
          %v653 = vld [vmem:[%s1 + $0x100] sm:$0xf]
          %v654 = vld [vmem:[%s1 + $0x104] sm:$0xf]
          %v655 = vld [vmem:[%s1 + $0x108] sm:$0xf]
          %v656 = vld [vmem:[%s1 + $0x10c] sm:$0xf]
          %v657 = vld [vmem:[%s1 + $0x110] sm:$0xf]
          %v658 = vld [vmem:[%s1 + $0x114] sm:$0xf]
          %v659 = vld [vmem:[%s1 + $0x118] sm:$0xf]
          %v660 = vld [vmem:[%s1 + $0x11c] sm:$0xf]
          %v661 = vld [vmem:[%s1 + $0x120] sm:$0xf]
          %v662 = vld [vmem:[%s1 + $0x124] sm:$0xf]
          %v663 = vld [vmem:[%s1 + $0x128] sm:$0xf]
          %v664 = vld [vmem:[%s1 + $0x12c] sm:$0xf]
          %v665 = vld [vmem:[%s1 + $0x130] sm:$0xf]
          %v666 = vld [vmem:[%s1 + $0x134] sm:$0xf]
          %v667 = vld [vmem:[%s1 + $0x138] sm:$0xf]
          %v668 = vld [vmem:[%s1 + $0x13c] sm:$0xf]
          %v669 = vld [vmem:[%s1 + $0x140] sm:$0xf]
          %v670 = vld [vmem:[%s1 + $0x144] sm:$0xf]
          %v671 = vld [vmem:[%s1 + $0x148] sm:$0xf]
          %v672 = vld [vmem:[%s1 + $0x14c] sm:$0xf]
          %v673 = vld [vmem:[%s1 + $0x150] sm:$0xf]
          %v674 = vld [vmem:[%s1 + $0x154] sm:$0xf]
          %v675 = vld [vmem:[%s1 + $0x158] sm:$0xf]
          %v676 = vld [vmem:[%s1 + $0x15c] sm:$0xf]
          %v677 = vld [vmem:[%s1 + $0x160] sm:$0xf]
          %v678 = vld [vmem:[%s1 + $0x164] sm:$0xf]
          %v679 = vld [vmem:[%s1 + $0x168] sm:$0xf]
          %v680 = vld [vmem:[%s1 + $0x16c] sm:$0xf]
          %v681 = vld [vmem:[%s1 + $0x170] sm:$0xf]
          %v682 = vld [vmem:[%s1 + $0x174] sm:$0xf]
          %v683 = vld [vmem:[%s1 + $0x178] sm:$0xf]
          %v684 = vld [vmem:[%s1 + $0x17c] sm:$0xf]
          %v685 = vld [vmem:[%s2] sm:$0xff]
          %v689 = vunpack.c.l.b16 %v586
          %v690 = vunpack.c.h.b16 %v586
          %v691 = vunpack.c.l.b16 %v587
          %v692 = vunpack.c.h.b16 %v587
          %v693 = vunpack.c.l.b16 %v588
          %v694 = vunpack.c.h.b16 %v588
          %v695 = vpack.c.b16 %v689, %v689
          %v696 = vpack.c.b16 %v690, %v690
          %v697 = vpack.c.b16 %v691, %v691
          %v698 = vpack.c.b16 %v692, %v692
          %v699 = vpack.c.b16 %v693, %v693
          %v700 = vpack.c.b16 %v694, %v694
          %v803 = vunpack.c.l.b16 %v589
          %v804 = vunpack.c.l.b16 %v590
          %v805 = vunpack.c.l.b16 %v591
          %v806 = vunpack.c.l.b16 %v592
          %v807 = vunpack.c.l.b16 %v593
          %v808 = vunpack.c.l.b16 %v594
          %v809 = vunpack.c.l.b16 %v595
          %v810 = vunpack.c.l.b16 %v596
          %v811 = vunpack.c.l.b16 %v597
          %v812 = vunpack.c.l.b16 %v598
          %v813 = vunpack.c.l.b16 %v599
          %v814 = vunpack.c.l.b16 %v600
          %v815 = vunpack.c.l.b16 %v601
          %v816 = vunpack.c.l.b16 %v602
          %v817 = vunpack.c.l.b16 %v603
          %v818 = vunpack.c.l.b16 %v604
          %v819 = vunpack.c.l.b16 %v605
          %v820 = vunpack.c.l.b16 %v606
          %v821 = vunpack.c.l.b16 %v607
          %v822 = vunpack.c.l.b16 %v608
          %v823 = vunpack.c.l.b16 %v609
          %v824 = vunpack.c.l.b16 %v610
          %v825 = vunpack.c.l.b16 %v611
          %v826 = vunpack.c.l.b16 %v612
          %v827 = vunpack.c.l.b16 %v613
          %v828 = vunpack.c.l.b16 %v614
          %v829 = vunpack.c.l.b16 %v615
          %v830 = vunpack.c.l.b16 %v616
          %v831 = vunpack.c.l.b16 %v617
          %v832 = vunpack.c.l.b16 %v618
          %v833 = vunpack.c.l.b16 %v619
          %v834 = vunpack.c.l.b16 %v620
          %v835 = vunpack.c.l.b16 %v621
          %v836 = vunpack.c.l.b16 %v622
          %v837 = vunpack.c.l.b16 %v623
          %v838 = vunpack.c.l.b16 %v624
          %v839 = vunpack.c.l.b16 %v625
          %v840 = vunpack.c.l.b16 %v626
          %v841 = vunpack.c.l.b16 %v627
          %v842 = vunpack.c.l.b16 %v628
          %v843 = vunpack.c.l.b16 %v629
          %v844 = vunpack.c.l.b16 %v630
          %v845 = vunpack.c.l.b16 %v631
          %v846 = vunpack.c.l.b16 %v632
          %v847 = vunpack.c.l.b16 %v633
          %v848 = vunpack.c.l.b16 %v634
          %v849 = vunpack.c.l.b16 %v635
          %v850 = vunpack.c.l.b16 %v636
          %v851 = vunpack.c.l.b16 %v637
          %v852 = vunpack.c.l.b16 %v638
          %v853 = vunpack.c.l.b16 %v639
          %v854 = vunpack.c.l.b16 %v640
          %v855 = vunpack.c.l.b16 %v641
          %v856 = vunpack.c.l.b16 %v642
          %v857 = vunpack.c.l.b16 %v643
          %v858 = vunpack.c.l.b16 %v644
          %v859 = vunpack.c.l.b16 %v645
          %v860 = vunpack.c.l.b16 %v646
          %v861 = vunpack.c.l.b16 %v647
          %v862 = vunpack.c.l.b16 %v648
          %v863 = vunpack.c.l.b16 %v649
          %v864 = vunpack.c.l.b16 %v650
          %v865 = vunpack.c.l.b16 %v651
          %v866 = vunpack.c.l.b16 %v652
          %v867 = vunpack.c.l.b16 %v653
          %v868 = vunpack.c.l.b16 %v654
          %v869 = vunpack.c.l.b16 %v655
          %v870 = vunpack.c.l.b16 %v656
          %v871 = vunpack.c.l.b16 %v657
          %v872 = vunpack.c.l.b16 %v658
          %v873 = vunpack.c.l.b16 %v659
          %v874 = vunpack.c.l.b16 %v660
          %v875 = vunpack.c.l.b16 %v661
          %v876 = vunpack.c.l.b16 %v662
          %v877 = vunpack.c.l.b16 %v663
          %v878 = vunpack.c.l.b16 %v664
          %v879 = vunpack.c.l.b16 %v665
          %v880 = vunpack.c.l.b16 %v666
          %v881 = vunpack.c.l.b16 %v667
          %v882 = vunpack.c.l.b16 %v668
          %v883 = vunpack.c.l.b16 %v669
          %v884 = vunpack.c.l.b16 %v670
          %v885 = vunpack.c.l.b16 %v671
          %v886 = vunpack.c.l.b16 %v672
          %v887 = vunpack.c.l.b16 %v673
          %v888 = vunpack.c.l.b16 %v674
          %v889 = vunpack.c.l.b16 %v675
          %v890 = vunpack.c.l.b16 %v676
          %v891 = vunpack.c.l.b16 %v677
          %v892 = vunpack.c.l.b16 %v678
          %v893 = vunpack.c.l.b16 %v679
          %v894 = vunpack.c.l.b16 %v680
          %v895 = vunpack.c.l.b16 %v681
          %v896 = vunpack.c.l.b16 %v682
          %v897 = vunpack.c.l.b16 %v683
          %v898 = vunpack.c.l.b16 %v684
          %v899 = vpack.c.b16 %v804, %v803
          %v900 = vpack.c.b16 %v806, %v805
          %v901 = vpack.c.b16 %v808, %v807
          %v902 = vpack.c.b16 %v810, %v809
          %v903 = vpack.c.b16 %v812, %v811
          %v904 = vpack.c.b16 %v814, %v813
          %v905 = vpack.c.b16 %v816, %v815
          %v906 = vpack.c.b16 %v818, %v817
          %v907 = vpack.c.b16 %v820, %v819
          %v908 = vpack.c.b16 %v822, %v821
          %v909 = vpack.c.b16 %v824, %v823
          %v910 = vpack.c.b16 %v826, %v825
          %v911 = vpack.c.b16 %v828, %v827
          %v912 = vpack.c.b16 %v830, %v829
          %v913 = vpack.c.b16 %v832, %v831
          %v914 = vpack.c.b16 %v834, %v833
          %v915 = vpack.c.b16 %v836, %v835
          %v916 = vpack.c.b16 %v838, %v837
          %v917 = vpack.c.b16 %v840, %v839
          %v918 = vpack.c.b16 %v842, %v841
          %v919 = vpack.c.b16 %v844, %v843
          %v920 = vpack.c.b16 %v846, %v845
          %v921 = vpack.c.b16 %v848, %v847
          %v922 = vpack.c.b16 %v850, %v849
          %v923 = vpack.c.b16 %v852, %v851
          %v924 = vpack.c.b16 %v854, %v853
          %v925 = vpack.c.b16 %v856, %v855
          %v926 = vpack.c.b16 %v858, %v857
          %v927 = vpack.c.b16 %v860, %v859
          %v928 = vpack.c.b16 %v862, %v861
          %v929 = vpack.c.b16 %v864, %v863
          %v930 = vpack.c.b16 %v866, %v865
          %v931 = vpack.c.b16 %v868, %v867
          %v932 = vpack.c.b16 %v870, %v869
          %v933 = vpack.c.b16 %v872, %v871
          %v934 = vpack.c.b16 %v874, %v873
          %v935 = vpack.c.b16 %v876, %v875
          %v936 = vpack.c.b16 %v878, %v877
          %v937 = vpack.c.b16 %v880, %v879
          %v938 = vpack.c.b16 %v882, %v881
          %v939 = vpack.c.b16 %v884, %v883
          %v940 = vpack.c.b16 %v886, %v885
          %v941 = vpack.c.b16 %v888, %v887
          %v942 = vpack.c.b16 %v890, %v889
          %v943 = vpack.c.b16 %v892, %v891
          %v944 = vpack.c.b16 %v894, %v893
          %v945 = vpack.c.b16 %v896, %v895
          %v946 = vpack.c.b16 %v898, %v897
          %995 = vmatprep.subr.bf16.mxu0 0
          %996 = vmatpush1.bf16.msra.mxu0 %v899
          %997 = vmatprep.subr.bf16.mxu0 0
          %998 = vmatpush1.bf16.msra.mxu0 %v900
          %999 = vmatprep.subr.bf16.mxu0 0
          %1000 = vmatpush1.bf16.msra.mxu0 %v901
          %1001 = vmatprep.subr.bf16.mxu0 0
          %1002 = vmatpush1.bf16.msra.mxu0 %v902
          %1003 = vmatprep.subr.bf16.mxu0 0
          %1004 = vmatpush1.bf16.msra.mxu0 %v903
          %1005 = vmatprep.subr.bf16.mxu0 0
          %1006 = vmatpush1.bf16.msra.mxu0 %v904
          %1007 = vmatprep.subr.bf16.mxu0 0
          %1008 = vmatpush1.bf16.msra.mxu0 %v905
          %1009 = vmatprep.subr.bf16.mxu0 0
          %1010 = vmatpush1.bf16.msra.mxu0 %v906
          %1011 = vmatprep.subr.bf16.mxu0 0
          %1012 = vmatpush1.bf16.msra.mxu0 %v907
          %1013 = vmatprep.subr.bf16.mxu0 0
          %1014 = vmatpush1.bf16.msra.mxu0 %v908
          %1015 = vmatprep.subr.bf16.mxu0 0
          %1016 = vmatpush1.bf16.msra.mxu0 %v909
          %1017 = vmatprep.subr.bf16.mxu0 0
          %1018 = vmatpush1.bf16.msra.mxu0 %v910
          %1019 = vmatprep.subr.bf16.mxu0 0
          %1020 = vmatpush1.bf16.msra.mxu0 %v911
          %1021 = vmatprep.subr.bf16.mxu0 0
          %1022 = vmatpush1.bf16.msra.mxu0 %v912
          %1023 = vmatprep.subr.bf16.mxu0 0
          %1024 = vmatpush1.bf16.msra.mxu0 %v913
          %1025 = vmatprep.subr.bf16.mxu0 0
          %1026 = vmatpush1.bf16.msra.mxu0 %v914
          %1027 = vmatprep.mubr.bf16.mxu0 %v696
          %1028 = vmatmul.mubr.bf16.gmra.mrb[0].mxu0 %v695
          %v1029 = vpop.f32.mrb[0].mxu0
          %v1030 = vadd.f32 %v685, %v1029
          %v1031 = vpop.f32.mrb[0].mxu0
          %v1032 = vpop.f32.mrb[0].mxu0
          %v1033 = vpop.f32.mrb[0].mxu0
          %1034 = vdwg.mxu0
          %1035 = vmatprep.subr.bf16.mxu0 0
          %1036 = vmatpush1.bf16.msra.mxu0 %v915
          %1037 = vmatprep.subr.bf16.mxu0 0
          %1038 = vmatpush1.bf16.msra.mxu0 %v916
          %1039 = vmatprep.subr.bf16.mxu0 0
          %1040 = vmatpush1.bf16.msra.mxu0 %v917
          %1041 = vmatprep.subr.bf16.mxu0 0
          %1042 = vmatpush1.bf16.msra.mxu0 %v918
          %1043 = vmatprep.subr.bf16.mxu0 0
          %1044 = vmatpush1.bf16.msra.mxu0 %v919
          %1045 = vmatprep.subr.bf16.mxu0 0
          %1046 = vmatpush1.bf16.msra.mxu0 %v920
          %1047 = vmatprep.subr.bf16.mxu0 0
          %1048 = vmatpush1.bf16.msra.mxu0 %v921
          %1049 = vmatprep.subr.bf16.mxu0 0
          %1050 = vmatpush1.bf16.msra.mxu0 %v922
          %1051 = vmatprep.subr.bf16.mxu0 0
          %1052 = vmatpush1.bf16.msra.mxu0 %v923
          %1053 = vmatprep.subr.bf16.mxu0 0
          %1054 = vmatpush1.bf16.msra.mxu0 %v924
          %1055 = vmatprep.subr.bf16.mxu0 0
          %1056 = vmatpush1.bf16.msra.mxu0 %v925
          %1057 = vmatprep.subr.bf16.mxu0 0
          %1058 = vmatpush1.bf16.msra.mxu0 %v926
          %1059 = vmatprep.subr.bf16.mxu0 0
          %1060 = vmatpush1.bf16.msra.mxu0 %v927
          %1061 = vmatprep.subr.bf16.mxu0 0
          %1062 = vmatpush1.bf16.msra.mxu0 %v928
          %1063 = vmatprep.subr.bf16.mxu0 0
          %1064 = vmatpush1.bf16.msra.mxu0 %v929
          %1065 = vmatprep.subr.bf16.mxu0 0
          %1066 = vmatpush1.bf16.msra.mxu0 %v930
          %1067 = vmatprep.mubr.bf16.mxu0 %v698
          %1068 = vmatmul.mubr.bf16.gmra.mrb[0].mxu0 %v697
          %v1069 = vpop.f32.mrb[0].mxu0
          %v1070 = vadd.f32 %v1030, %v1069
          %v1071 = vpop.f32.mrb[0].mxu0
          %v1072 = vpop.f32.mrb[0].mxu0
          %v1073 = vpop.f32.mrb[0].mxu0
          %1074 = vdwg.mxu0
          %1075 = vmatprep.subr.bf16.mxu0 0
          %1076 = vmatpush1.bf16.msra.mxu0 %v931
          %1077 = vmatprep.subr.bf16.mxu0 0
          %1078 = vmatpush1.bf16.msra.mxu0 %v932
          %1079 = vmatprep.subr.bf16.mxu0 0
          %1080 = vmatpush1.bf16.msra.mxu0 %v933
          %1081 = vmatprep.subr.bf16.mxu0 0
          %1082 = vmatpush1.bf16.msra.mxu0 %v934
          %1083 = vmatprep.subr.bf16.mxu0 0
          %1084 = vmatpush1.bf16.msra.mxu0 %v935
          %1085 = vmatprep.subr.bf16.mxu0 0
          %1086 = vmatpush1.bf16.msra.mxu0 %v936
          %1087 = vmatprep.subr.bf16.mxu0 0
          %1088 = vmatpush1.bf16.msra.mxu0 %v937
          %1089 = vmatprep.subr.bf16.mxu0 0
          %1090 = vmatpush1.bf16.msra.mxu0 %v938
          %1091 = vmatprep.subr.bf16.mxu0 0
          %1092 = vmatpush1.bf16.msra.mxu0 %v939
          %1093 = vmatprep.subr.bf16.mxu0 0
          %1094 = vmatpush1.bf16.msra.mxu0 %v940
          %1095 = vmatprep.subr.bf16.mxu0 0
          %1096 = vmatpush1.bf16.msra.mxu0 %v941
          %1097 = vmatprep.subr.bf16.mxu0 0
          %1098 = vmatpush1.bf16.msra.mxu0 %v942
          %1099 = vmatprep.subr.bf16.mxu0 0
          %1100 = vmatpush1.bf16.msra.mxu0 %v943
          %1101 = vmatprep.subr.bf16.mxu0 0
          %1102 = vmatpush1.bf16.msra.mxu0 %v944
          %1103 = vmatprep.subr.bf16.mxu0 0
          %1104 = vmatpush1.bf16.msra.mxu0 %v945
          %1105 = vmatprep.subr.bf16.mxu0 0
          %1106 = vmatpush1.bf16.msra.mxu0 %v946
          %1107 = vmatprep.mubr.bf16.mxu0 %v700
          %1108 = vmatmul.mubr.bf16.gmra.mrb[0].mxu0 %v699
          %v1109 = vpop.f32.mrb[0].mxu0
          %v1110 = vadd.f32 %v1070, %v1109
          %v1111 = vpop.f32.mrb[0].mxu0
          %v1112 = vpop.f32.mrb[0].mxu0
          %v1113 = vpop.f32.mrb[0].mxu0
          %1114 = vdwg.mxu0
          %vm1115 = vcmask 523264
          %1116 = vst.msk [vmem:[#allocation2] sm:$0xff] %vm1115, %v1110
        $region76: #{vit_forward.1} parent=71 // pred_fallthru
          _
        %v1117 = vld [vmem:[%s580] sm:$0x3f]
        %v1118 = vld [vmem:[#allocation2] sm:$0xff]
        %vm1119 = vcmask 523264
        %v1120 = vsel %vm1119, %v1118, 0.0
        %1121 = vadd.xlane.f32.xlu0 %v1120
        %v1122 = vpop.xlane.xlu0 %1121
        %v1123 = vrcp.pop 64.0
        %v1124 = vmul.f32 %v1122, %v1123
        %v1125 = vsub.f32 %v1118, %v1124
        %v1126 = vmul.f32 %v1125, %v1125
        %v1127 = vsel %vm1119, %v1126, 0.0
        %1128 = vadd.xlane.f32.xlu0 %v1127
        %v1129 = vpop.xlane.xlu0 %1128
        %v1130 = vmul.f32 %v1129, %v1123
        %v1131 = vadd.f32 %v1130, 1e-06
        %v1132 = vrsqrt.pop %v1131
        %v1133 = vmul.f32 %v1125, %v1132
        %v1134 = vlaneseq
        %v1135 = vshrl.u32 %v1134, 7
        %v1136 = vsub.s32 0, %v1135
        %v1137 = vrot.slane %v1117, %v1136
        %v1138 = vmul.f32 %v1133, %v1137
        %v1139 = vlaneseq
        %v1140 = vshrl.u32 %v1139, 7
        %v1141 = vsub.s32 1, %v1140
        %v1142 = vrot.slane %v1117, %v1141
        %v1143 = vadd.f32 %v1138, %v1142
        %v1144 = vld [vmem:[%s553] sm:$0xff]
        %v1145 = vld [vmem:[%s553 + $0x8] sm:$0xff]
        %v1146 = vld [vmem:[%s553 + $0x10] sm:$0xff]
        %v1147 = vld [vmem:[%s553 + $0x18] sm:$0xff]
        %v1148 = vld [vmem:[%s553 + $0x20] sm:$0xff]
        %v1149 = vld [vmem:[%s553 + $0x28] sm:$0xff]
        %v1150 = vld [vmem:[%s553 + $0x30] sm:$0xff]
        %v1151 = vld [vmem:[%s553 + $0x38] sm:$0xff]
        %v1152 = vld [vmem:[%s557] sm:$0x3]
        %v1153 = vpack.c.bf16 %v1143, %v1143
        %v1155 = vlaneseq
        %v1156 = vshrl.u32 %v1155, 7
        %v1157 = vsub.s32 0, %v1156
        %v1158 = vrot.slane %v1152, %v1157
        %v1159 = vlaneseq
        %v1160 = vshrl.u32 %v1159, 7
        %v1161 = vsub.s32 1, %v1160
        %v1162 = vrot.slane %v1152, %v1161
        %v1173 = vunpack.c.l.b16 %v1144
        %v1174 = vunpack.c.h.b16 %v1144
        %v1175 = vunpack.c.l.b16 %v1145
        %v1176 = vunpack.c.h.b16 %v1145
        %v1177 = vunpack.c.l.b16 %v1146
        %v1178 = vunpack.c.h.b16 %v1146
        %v1179 = vunpack.c.l.b16 %v1147
        %v1180 = vunpack.c.h.b16 %v1147
        %v1181 = vunpack.c.l.b16 %v1148
        %v1182 = vunpack.c.h.b16 %v1148
        %v1183 = vunpack.c.l.b16 %v1149
        %v1184 = vunpack.c.h.b16 %v1149
        %v1185 = vunpack.c.l.b16 %v1150
        %v1186 = vunpack.c.h.b16 %v1150
        %v1187 = vunpack.c.l.b16 %v1151
        %v1188 = vunpack.c.h.b16 %v1151
        %v1189 = vpack.c.b16 %v1175, %v1173
        %v1190 = vpack.c.b16 %v1176, %v1174
        %v1191 = vpack.c.b16 %v1179, %v1177
        %v1192 = vpack.c.b16 %v1180, %v1178
        %v1193 = vpack.c.b16 %v1183, %v1181
        %v1194 = vpack.c.b16 %v1184, %v1182
        %v1195 = vpack.c.b16 %v1187, %v1185
        %v1196 = vpack.c.b16 %v1188, %v1186
        %v1206 = vsel %vm1119, %v1153, 0
        %1208 = vmatprep.subr.bf16.mxu0 %v1190
        %1209 = vmatpush1.bf16.msra.mxu0 %v1189
        %1210 = vmatprep.subr.bf16.mxu0 %v1192
        %1211 = vmatpush1.bf16.msra.mxu0 %v1191
        %1212 = vmatprep.subr.bf16.mxu0 %v1194
        %1213 = vmatpush1.bf16.msra.mxu0 %v1193
        %1214 = vmatprep.subr.bf16.mxu0 %v1196
        %1215 = vmatpush1.bf16.msra.mxu0 %v1195
        %1216 = vmatprep.subr.bf16.mxu0 0
        %1217 = vmatpush1.bf16.msra.mxu0 0
        %1218 = vmatprep.subr.bf16.mxu0 0
        %1219 = vmatpush1.bf16.msra.mxu0 0
        %1220 = vmatprep.subr.bf16.mxu0 0
        %1221 = vmatpush1.bf16.msra.mxu0 0
        %1222 = vmatprep.subr.bf16.mxu0 0
        %1223 = vmatpush1.bf16.msra.mxu0 0
        %1224 = vmatprep.subr.bf16.mxu0 0
        %1225 = vmatpush1.bf16.msra.mxu0 0
        %1226 = vmatprep.subr.bf16.mxu0 0
        %1227 = vmatpush1.bf16.msra.mxu0 0
        %1228 = vmatprep.subr.bf16.mxu0 0
        %1229 = vmatpush1.bf16.msra.mxu0 0
        %1230 = vmatprep.subr.bf16.mxu0 0
        %1231 = vmatpush1.bf16.msra.mxu0 0
        %1232 = vmatprep.subr.bf16.mxu0 0
        %1233 = vmatpush1.bf16.msra.mxu0 0
        %1234 = vmatprep.subr.bf16.mxu0 0
        %1235 = vmatpush1.bf16.msra.mxu0 0
        %1236 = vmatprep.subr.bf16.mxu0 0
        %1237 = vmatpush1.bf16.msra.mxu0 0
        %1238 = vmatprep.subr.bf16.mxu0 0
        %1239 = vmatpush1.bf16.msra.mxu0 0
        %1240 = vmatprep.mubr.bf16.mxu0 0
        %1241 = vmatmul.mubr.bf16.gmra.mrb[0].mxu0 %v1206
        %v1242 = vpop.f32.mrb[0].mxu0
        %v1243 = vadd.f32 %v1158, %v1242
        %v1244 = vpop.f32.mrb[0].mxu0
        %v1245 = vadd.f32 %v1162, %v1244
        %v1246 = vpop.f32.mrb[0].mxu0
        %v1247 = vpop.f32.mrb[0].mxu0
        %1248 = vdwg.mxu0
        %v1249 = vlaneseq
        %v1250 = vand.u32 %v1249, 127
        %vm1251 = vcmp.lt.s32.totalorder %v1250, 5
        %v1252 = vpack.c.bf16 %v1243, %v1243
        %1254 = vrot.lane.b32.xlu0 %v1252, 64
        %v1255 = vpop.permute.xlu0 %1254
        %vm1256 = vcmask 130048
        %v1258 = vsel %vm1256, %v1252, 0
        %v1261 = vsel %vm1256, %v1255, 0
        %1263 = vmatprep.subr.bf16.mxu0 0
        %1264 = vmatpush1.bf16.xpose.msra.mxu0 %v1261
        %1265 = vmatprep.subr.bf16.mxu0 0
        %1266 = vmatpush1.bf16.xpose.msra.mxu0 0
        %1267 = vmatprep.subr.bf16.mxu0 0
        %1268 = vmatpush1.bf16.xpose.msra.mxu0 0
        %1269 = vmatprep.subr.bf16.mxu0 0
        %1270 = vmatpush1.bf16.xpose.msra.mxu0 0
        %1271 = vmatprep.subr.bf16.mxu0 0
        %1272 = vmatpush1.bf16.xpose.msra.mxu0 0
        %1273 = vmatprep.subr.bf16.mxu0 0
        %1274 = vmatpush1.bf16.xpose.msra.mxu0 0
        %1275 = vmatprep.subr.bf16.mxu0 0
        %1276 = vmatpush1.bf16.xpose.msra.mxu0 0
        %1277 = vmatprep.subr.bf16.mxu0 0
        %1278 = vmatpush1.bf16.xpose.msra.mxu0 0
        %1279 = vmatprep.subr.bf16.mxu0 0
        %1280 = vmatpush1.bf16.xpose.msra.mxu0 0
        %1281 = vmatprep.subr.bf16.mxu0 0
        %1282 = vmatpush1.bf16.xpose.msra.mxu0 0
        %1283 = vmatprep.subr.bf16.mxu0 0
        %1284 = vmatpush1.bf16.xpose.msra.mxu0 0
        %1285 = vmatprep.subr.bf16.mxu0 0
        %1286 = vmatpush1.bf16.xpose.msra.mxu0 0
        %1287 = vmatprep.subr.bf16.mxu0 0
        %1288 = vmatpush1.bf16.xpose.msra.mxu0 0
        %1289 = vmatprep.subr.bf16.mxu0 0
        %1290 = vmatpush1.bf16.xpose.msra.mxu0 0
        %1291 = vmatprep.subr.bf16.mxu0 0
        %1292 = vmatpush1.bf16.xpose.msra.mxu0 0
        %1293 = vmatprep.subr.bf16.mxu0 0
        %1294 = vmatpush1.bf16.xpose.msra.mxu0 0
        %1295 = vmatprep.mubr.bf16.mxu0 0
        %1296 = vmatmul.mubr.bf16.gmra.mrb[0].mxu0 %v1258
        %v1297 = vpop.f32.mrb[0].mxu0
        %v1298 = vadd.f32 0.0, %v1297
        %v1299 = vpop.f32.mrb[0].mxu0
        %v1300 = vpop.f32.mrb[0].mxu0
        %v1301 = vpop.f32.mrb[0].mxu0
        %1302 = vdwg.mxu0
        %v1303 = vsel %vm1251, 1, 0
        %vm1304 = vcmp.eq.s32.totalorder %v1303, 1
        %v1305 = vsel %vm1304, %v1298, -1e+30
        %vm1306 = vcmask 64512
        %v1307 = vsel %vm1306, %v1305, -inf
        %1308 = vmax.xlane.f32.xlu0 %v1307
        %v1309 = vpop.xlane.xlu0 %1308
        %v1310 = vsub.f32 %v1305, %v1309
        %v1311 = vmul.f32 %v1310, 1.442695
        %v1312 = vpow.pop %v1311
        %v1313 = vsel %vm1306, %v1312, 0.0
        %1314 = vadd.xlane.f32.xlu0 %v1313
        %v1315 = vpop.xlane.xlu0 %1314
        %v1316 = vrcp.pop %v1315
        %v1317 = vmul.f32 %v1312, %v1316
        %v1318 = vpack.c.bf16 %v1317, %v1317
        %v1319 = vpack.c.bf16 %v1245, %v1245
        %v1321 = vsel %vm1306, %v1318, 0
        %vm1323 = vcmask 1043456
        %v1325 = vsel %vm1323, %v1319, 0
        %1327 = vmatprep.subr.bf16.mxu0 0
        %1328 = vmatpush1.bf16.msra.mxu0 %v1325
        %1329 = vmatprep.subr.bf16.mxu0 0
        %1330 = vmatpush1.bf16.msra.mxu0 0
        %1331 = vmatprep.subr.bf16.mxu0 0
        %1332 = vmatpush1.bf16.msra.mxu0 0
        %1333 = vmatprep.subr.bf16.mxu0 0
        %1334 = vmatpush1.bf16.msra.mxu0 0
        %1335 = vmatprep.subr.bf16.mxu0 0
        %1336 = vmatpush1.bf16.msra.mxu0 0
        %1337 = vmatprep.subr.bf16.mxu0 0
        %1338 = vmatpush1.bf16.msra.mxu0 0
        %1339 = vmatprep.subr.bf16.mxu0 0
        %1340 = vmatpush1.bf16.msra.mxu0 0
        %1341 = vmatprep.subr.bf16.mxu0 0
        %1342 = vmatpush1.bf16.msra.mxu0 0
        %1343 = vmatprep.subr.bf16.mxu0 0
        %1344 = vmatpush1.bf16.msra.mxu0 0
        %1345 = vmatprep.subr.bf16.mxu0 0
        %1346 = vmatpush1.bf16.msra.mxu0 0
        %1347 = vmatprep.subr.bf16.mxu0 0
        %1348 = vmatpush1.bf16.msra.mxu0 0
        %1349 = vmatprep.subr.bf16.mxu0 0
        %1350 = vmatpush1.bf16.msra.mxu0 0
        %1351 = vmatprep.subr.bf16.mxu0 0
        %1352 = vmatpush1.bf16.msra.mxu0 0
        %1353 = vmatprep.subr.bf16.mxu0 0
        %1354 = vmatpush1.bf16.msra.mxu0 0
        %1355 = vmatprep.subr.bf16.mxu0 0
        %1356 = vmatpush1.bf16.msra.mxu0 0
        %1357 = vmatprep.subr.bf16.mxu0 0
        %1358 = vmatpush1.bf16.msra.mxu0 0
        %1359 = vmatprep.mubr.bf16.mxu0 0
        %1360 = vmatmul.mubr.bf16.gmra.mrb[0].mxu0 %v1321
        %v1361 = vpop.f32.mrb[0].mxu0
        %v1362 = vadd.f32 0.0, %v1361
        %v1363 = vpop.f32.mrb[0].mxu0
        %v1364 = vpop.f32.mrb[0].mxu0
        %v1365 = vpop.f32.mrb[0].mxu0
        %1366 = vdwg.mxu0
        %1367 = vrot.lane.b32.xlu0 %v1252, 112
        %v1368 = vpop.permute.xlu0 %1367
        %1369 = vrot.lane.b32.xlu0 %v1252, 48
        %v1370 = vpop.permute.xlu0 %1369
        %v1372 = vsel %vm1256, %v1368, 0
        %v1375 = vsel %vm1256, %v1370, 0
        %1377 = vmatprep.subr.bf16.mxu0 0
        %1378 = vmatpush1.bf16.xpose.msra.mxu0 %v1375
        %1379 = vmatprep.subr.bf16.mxu0 0
        %1380 = vmatpush1.bf16.xpose.msra.mxu0 0
        %1381 = vmatprep.subr.bf16.mxu0 0
        %1382 = vmatpush1.bf16.xpose.msra.mxu0 0
        %1383 = vmatprep.subr.bf16.mxu0 0
        %1384 = vmatpush1.bf16.xpose.msra.mxu0 0
        %1385 = vmatprep.subr.bf16.mxu0 0
        %1386 = vmatpush1.bf16.xpose.msra.mxu0 0
        %1387 = vmatprep.subr.bf16.mxu0 0
        %1388 = vmatpush1.bf16.xpose.msra.mxu0 0
        %1389 = vmatprep.subr.bf16.mxu0 0
        %1390 = vmatpush1.bf16.xpose.msra.mxu0 0
        %1391 = vmatprep.subr.bf16.mxu0 0
        %1392 = vmatpush1.bf16.xpose.msra.mxu0 0
        %1393 = vmatprep.subr.bf16.mxu0 0
        %1394 = vmatpush1.bf16.xpose.msra.mxu0 0
        %1395 = vmatprep.subr.bf16.mxu0 0
        %1396 = vmatpush1.bf16.xpose.msra.mxu0 0
        %1397 = vmatprep.subr.bf16.mxu0 0
        %1398 = vmatpush1.bf16.xpose.msra.mxu0 0
        %1399 = vmatprep.subr.bf16.mxu0 0
        %1400 = vmatpush1.bf16.xpose.msra.mxu0 0
        %1401 = vmatprep.subr.bf16.mxu0 0
        %1402 = vmatpush1.bf16.xpose.msra.mxu0 0
        %1403 = vmatprep.subr.bf16.mxu0 0
        %1404 = vmatpush1.bf16.xpose.msra.mxu0 0
        %1405 = vmatprep.subr.bf16.mxu0 0
        %1406 = vmatpush1.bf16.xpose.msra.mxu0 0
        %1407 = vmatprep.subr.bf16.mxu0 0
        %1408 = vmatpush1.bf16.xpose.msra.mxu0 0
        %1409 = vmatprep.mubr.bf16.mxu0 0
        %1410 = vmatmul.mubr.bf16.gmra.mrb[0].mxu0 %v1372
        %v1411 = vpop.f32.mrb[0].mxu0
        %v1412 = vadd.f32 0.0, %v1411
        %v1413 = vpop.f32.mrb[0].mxu0
        %v1414 = vpop.f32.mrb[0].mxu0
        %v1415 = vpop.f32.mrb[0].mxu0
        %1416 = vdwg.mxu0
        %v1417 = vsel %vm1304, %v1412, -1e+30
        %v1418 = vsel %vm1306, %v1417, -inf
        %1419 = vmax.xlane.f32.xlu0 %v1418
        %v1420 = vpop.xlane.xlu0 %1419
        %v1421 = vsub.f32 %v1417, %v1420
        %v1422 = vmul.f32 %v1421, 1.442695
        %v1423 = vpow.pop %v1422
        %v1424 = vsel %vm1306, %v1423, 0.0
        %1425 = vadd.xlane.f32.xlu0 %v1424
        %v1426 = vpop.xlane.xlu0 %1425
        %v1427 = vrcp.pop %v1426
        %v1428 = vmul.f32 %v1423, %v1427
        %v1429 = vpack.c.bf16 %v1428, %v1428
        %1431 = vrot.lane.b32.xlu0 %v1319, 112
        %v1432 = vpop.permute.xlu0 %1431
        %v1434 = vsel %vm1306, %v1429, 0
        %v1437 = vsel %vm1323, %v1432, 0
        %1439 = vmatprep.subr.bf16.mxu0 0
        %1440 = vmatpush1.bf16.msra.mxu0 %v1437
        %1441 = vmatprep.subr.bf16.mxu0 0
        %1442 = vmatpush1.bf16.msra.mxu0 0
        %1443 = vmatprep.subr.bf16.mxu0 0
        %1444 = vmatpush1.bf16.msra.mxu0 0
        %1445 = vmatprep.subr.bf16.mxu0 0
        %1446 = vmatpush1.bf16.msra.mxu0 0
        %1447 = vmatprep.subr.bf16.mxu0 0
        %1448 = vmatpush1.bf16.msra.mxu0 0
        %1449 = vmatprep.subr.bf16.mxu0 0
        %1450 = vmatpush1.bf16.msra.mxu0 0
        %1451 = vmatprep.subr.bf16.mxu0 0
        %1452 = vmatpush1.bf16.msra.mxu0 0
        %1453 = vmatprep.subr.bf16.mxu0 0
        %1454 = vmatpush1.bf16.msra.mxu0 0
        %1455 = vmatprep.subr.bf16.mxu0 0
        %1456 = vmatpush1.bf16.msra.mxu0 0
        %1457 = vmatprep.subr.bf16.mxu0 0
        %1458 = vmatpush1.bf16.msra.mxu0 0
        %1459 = vmatprep.subr.bf16.mxu0 0
        %1460 = vmatpush1.bf16.msra.mxu0 0
        %1461 = vmatprep.subr.bf16.mxu0 0
        %1462 = vmatpush1.bf16.msra.mxu0 0
        %1463 = vmatprep.subr.bf16.mxu0 0
        %1464 = vmatpush1.bf16.msra.mxu0 0
        %1465 = vmatprep.subr.bf16.mxu0 0
        %1466 = vmatpush1.bf16.msra.mxu0 0
        %1467 = vmatprep.subr.bf16.mxu0 0
        %1468 = vmatpush1.bf16.msra.mxu0 0
        %1469 = vmatprep.subr.bf16.mxu0 0
        %1470 = vmatpush1.bf16.msra.mxu0 0
        %1471 = vmatprep.mubr.bf16.mxu0 0
        %1472 = vmatmul.mubr.bf16.gmra.mrb[0].mxu0 %v1434
        %v1473 = vpop.f32.mrb[0].mxu0
        %v1474 = vadd.f32 0.0, %v1473
        %v1475 = vpop.f32.mrb[0].mxu0
        %v1476 = vpop.f32.mrb[0].mxu0
        %v1477 = vpop.f32.mrb[0].mxu0
        %1478 = vdwg.mxu0
        %1479 = vrot.lane.b32.xlu0 %v1252, 96
        %v1480 = vpop.permute.xlu0 %1479
        %1481 = vrot.lane.b32.xlu0 %v1252, 32
        %v1482 = vpop.permute.xlu0 %1481
        %v1484 = vsel %vm1256, %v1480, 0
        %v1487 = vsel %vm1256, %v1482, 0
        %1489 = vmatprep.subr.bf16.mxu0 0
        %1490 = vmatpush1.bf16.xpose.msra.mxu0 %v1487
        %1491 = vmatprep.subr.bf16.mxu0 0
        %1492 = vmatpush1.bf16.xpose.msra.mxu0 0
        %1493 = vmatprep.subr.bf16.mxu0 0
        %1494 = vmatpush1.bf16.xpose.msra.mxu0 0
        %1495 = vmatprep.subr.bf16.mxu0 0
        %1496 = vmatpush1.bf16.xpose.msra.mxu0 0
        %1497 = vmatprep.subr.bf16.mxu0 0
        %1498 = vmatpush1.bf16.xpose.msra.mxu0 0
        %1499 = vmatprep.subr.bf16.mxu0 0
        %1500 = vmatpush1.bf16.xpose.msra.mxu0 0
        %1501 = vmatprep.subr.bf16.mxu0 0
        %1502 = vmatpush1.bf16.xpose.msra.mxu0 0
        %1503 = vmatprep.subr.bf16.mxu0 0
        %1504 = vmatpush1.bf16.xpose.msra.mxu0 0
        %1505 = vmatprep.subr.bf16.mxu0 0
        %1506 = vmatpush1.bf16.xpose.msra.mxu0 0
        %1507 = vmatprep.subr.bf16.mxu0 0
        %1508 = vmatpush1.bf16.xpose.msra.mxu0 0
        %1509 = vmatprep.subr.bf16.mxu0 0
        %1510 = vmatpush1.bf16.xpose.msra.mxu0 0
        %1511 = vmatprep.subr.bf16.mxu0 0
        %1512 = vmatpush1.bf16.xpose.msra.mxu0 0
        %1513 = vmatprep.subr.bf16.mxu0 0
        %1514 = vmatpush1.bf16.xpose.msra.mxu0 0
        %1515 = vmatprep.subr.bf16.mxu0 0
        %1516 = vmatpush1.bf16.xpose.msra.mxu0 0
        %1517 = vmatprep.subr.bf16.mxu0 0
        %1518 = vmatpush1.bf16.xpose.msra.mxu0 0
        %1519 = vmatprep.subr.bf16.mxu0 0
        %1520 = vmatpush1.bf16.xpose.msra.mxu0 0
        %1521 = vmatprep.mubr.bf16.mxu0 0
        %1522 = vmatmul.mubr.bf16.gmra.mrb[0].mxu0 %v1484
        %v1523 = vpop.f32.mrb[0].mxu0
        %v1524 = vadd.f32 0.0, %v1523
        %v1525 = vpop.f32.mrb[0].mxu0
        %v1526 = vpop.f32.mrb[0].mxu0
        %v1527 = vpop.f32.mrb[0].mxu0
        %1528 = vdwg.mxu0
        %v1529 = vsel %vm1304, %v1524, -1e+30
        %v1530 = vsel %vm1306, %v1529, -inf
        %1531 = vmax.xlane.f32.xlu0 %v1530
        %v1532 = vpop.xlane.xlu0 %1531
        %v1533 = vsub.f32 %v1529, %v1532
        %v1534 = vmul.f32 %v1533, 1.442695
        %v1535 = vpow.pop %v1534
        %v1536 = vsel %vm1306, %v1535, 0.0
        %1537 = vadd.xlane.f32.xlu0 %v1536
        %v1538 = vpop.xlane.xlu0 %1537
        %v1539 = vrcp.pop %v1538
        %v1540 = vmul.f32 %v1535, %v1539
        %v1541 = vpack.c.bf16 %v1540, %v1540
        %1542 = vrot.lane.b32.xlu0 %v1319, 96
        %v1543 = vpop.permute.xlu0 %1542
        %v1545 = vsel %vm1306, %v1541, 0
        %v1548 = vsel %vm1323, %v1543, 0
        %1550 = vmatprep.subr.bf16.mxu0 0
        %1551 = vmatpush1.bf16.msra.mxu0 %v1548
        %1552 = vmatprep.subr.bf16.mxu0 0
        %1553 = vmatpush1.bf16.msra.mxu0 0
        %1554 = vmatprep.subr.bf16.mxu0 0
        %1555 = vmatpush1.bf16.msra.mxu0 0
        %1556 = vmatprep.subr.bf16.mxu0 0
        %1557 = vmatpush1.bf16.msra.mxu0 0
        %1558 = vmatprep.subr.bf16.mxu0 0
        %1559 = vmatpush1.bf16.msra.mxu0 0
        %1560 = vmatprep.subr.bf16.mxu0 0
        %1561 = vmatpush1.bf16.msra.mxu0 0
        %1562 = vmatprep.subr.bf16.mxu0 0
        %1563 = vmatpush1.bf16.msra.mxu0 0
        %1564 = vmatprep.subr.bf16.mxu0 0
        %1565 = vmatpush1.bf16.msra.mxu0 0
        %1566 = vmatprep.subr.bf16.mxu0 0
        %1567 = vmatpush1.bf16.msra.mxu0 0
        %1568 = vmatprep.subr.bf16.mxu0 0
        %1569 = vmatpush1.bf16.msra.mxu0 0
        %1570 = vmatprep.subr.bf16.mxu0 0
        %1571 = vmatpush1.bf16.msra.mxu0 0
        %1572 = vmatprep.subr.bf16.mxu0 0
        %1573 = vmatpush1.bf16.msra.mxu0 0
        %1574 = vmatprep.subr.bf16.mxu0 0
        %1575 = vmatpush1.bf16.msra.mxu0 0
        %1576 = vmatprep.subr.bf16.mxu0 0
        %1577 = vmatpush1.bf16.msra.mxu0 0
        %1578 = vmatprep.subr.bf16.mxu0 0
        %1579 = vmatpush1.bf16.msra.mxu0 0
        %1580 = vmatprep.subr.bf16.mxu0 0
        %1581 = vmatpush1.bf16.msra.mxu0 0
        %1582 = vmatprep.mubr.bf16.mxu0 0
        %1583 = vmatmul.mubr.bf16.gmra.mrb[0].mxu0 %v1545
        %v1584 = vpop.f32.mrb[0].mxu0
        %v1585 = vadd.f32 0.0, %v1584
        %v1586 = vpop.f32.mrb[0].mxu0
        %v1587 = vpop.f32.mrb[0].mxu0
        %v1588 = vpop.f32.mrb[0].mxu0
        %1589 = vdwg.mxu0
        %1590 = vrot.lane.b32.xlu0 %v1252, 80
        %v1591 = vpop.permute.xlu0 %1590
        %1592 = vrot.lane.b32.xlu0 %v1252, 16
        %v1593 = vpop.permute.xlu0 %1592
        %v1595 = vsel %vm1256, %v1591, 0
        %v1598 = vsel %vm1256, %v1593, 0
        %1600 = vmatprep.subr.bf16.mxu0 0
        %1601 = vmatpush1.bf16.xpose.msra.mxu0 %v1598
        %1602 = vmatprep.subr.bf16.mxu0 0
        %1603 = vmatpush1.bf16.xpose.msra.mxu0 0
        %1604 = vmatprep.subr.bf16.mxu0 0
        %1605 = vmatpush1.bf16.xpose.msra.mxu0 0
        %1606 = vmatprep.subr.bf16.mxu0 0
        %1607 = vmatpush1.bf16.xpose.msra.mxu0 0
        %1608 = vmatprep.subr.bf16.mxu0 0
        %1609 = vmatpush1.bf16.xpose.msra.mxu0 0
        %1610 = vmatprep.subr.bf16.mxu0 0
        %1611 = vmatpush1.bf16.xpose.msra.mxu0 0
        %1612 = vmatprep.subr.bf16.mxu0 0
        %1613 = vmatpush1.bf16.xpose.msra.mxu0 0
        %1614 = vmatprep.subr.bf16.mxu0 0
        %1615 = vmatpush1.bf16.xpose.msra.mxu0 0
        %1616 = vmatprep.subr.bf16.mxu0 0
        %1617 = vmatpush1.bf16.xpose.msra.mxu0 0
        %1618 = vmatprep.subr.bf16.mxu0 0
        %1619 = vmatpush1.bf16.xpose.msra.mxu0 0
        %1620 = vmatprep.subr.bf16.mxu0 0
        %1621 = vmatpush1.bf16.xpose.msra.mxu0 0
        %1622 = vmatprep.subr.bf16.mxu0 0
        %1623 = vmatpush1.bf16.xpose.msra.mxu0 0
        %1624 = vmatprep.subr.bf16.mxu0 0
        %1625 = vmatpush1.bf16.xpose.msra.mxu0 0
        %1626 = vmatprep.subr.bf16.mxu0 0
        %1627 = vmatpush1.bf16.xpose.msra.mxu0 0
        %1628 = vmatprep.subr.bf16.mxu0 0
        %1629 = vmatpush1.bf16.xpose.msra.mxu0 0
        %1630 = vmatprep.subr.bf16.mxu0 0
        %1631 = vmatpush1.bf16.xpose.msra.mxu0 0
        %1632 = vmatprep.mubr.bf16.mxu0 0
        %1633 = vmatmul.mubr.bf16.gmra.mrb[0].mxu0 %v1595
        %v1634 = vpop.f32.mrb[0].mxu0
        %v1635 = vadd.f32 0.0, %v1634
        %v1636 = vpop.f32.mrb[0].mxu0
        %v1637 = vpop.f32.mrb[0].mxu0
        %v1638 = vpop.f32.mrb[0].mxu0
        %1639 = vdwg.mxu0
        %v1640 = vsel %vm1304, %v1635, -1e+30
        %v1641 = vsel %vm1306, %v1640, -inf
        %1642 = vmax.xlane.f32.xlu0 %v1641
        %v1643 = vpop.xlane.xlu0 %1642
        %v1644 = vsub.f32 %v1640, %v1643
        %v1645 = vmul.f32 %v1644, 1.442695
        %v1646 = vpow.pop %v1645
        %v1647 = vsel %vm1306, %v1646, 0.0
        %1648 = vadd.xlane.f32.xlu0 %v1647
        %v1649 = vpop.xlane.xlu0 %1648
        %v1650 = vrcp.pop %v1649
        %v1651 = vmul.f32 %v1646, %v1650
        %v1652 = vpack.c.bf16 %v1651, %v1651
        %1653 = vrot.lane.b32.xlu0 %v1319, 80
        %v1654 = vpop.permute.xlu0 %1653
        %v1656 = vsel %vm1306, %v1652, 0
        %v1659 = vsel %vm1323, %v1654, 0
        %1661 = vmatprep.subr.bf16.mxu0 0
        %1662 = vmatpush1.bf16.msra.mxu0 %v1659
        %1663 = vmatprep.subr.bf16.mxu0 0
        %1664 = vmatpush1.bf16.msra.mxu0 0
        %1665 = vmatprep.subr.bf16.mxu0 0
        %1666 = vmatpush1.bf16.msra.mxu0 0
        %1667 = vmatprep.subr.bf16.mxu0 0
        %1668 = vmatpush1.bf16.msra.mxu0 0
        %1669 = vmatprep.subr.bf16.mxu0 0
        %1670 = vmatpush1.bf16.msra.mxu0 0
        %1671 = vmatprep.subr.bf16.mxu0 0
        %1672 = vmatpush1.bf16.msra.mxu0 0
        %1673 = vmatprep.subr.bf16.mxu0 0
        %1674 = vmatpush1.bf16.msra.mxu0 0
        %1675 = vmatprep.subr.bf16.mxu0 0
        %1676 = vmatpush1.bf16.msra.mxu0 0
        %1677 = vmatprep.subr.bf16.mxu0 0
        %1678 = vmatpush1.bf16.msra.mxu0 0
        %1679 = vmatprep.subr.bf16.mxu0 0
        %1680 = vmatpush1.bf16.msra.mxu0 0
        %1681 = vmatprep.subr.bf16.mxu0 0
        %1682 = vmatpush1.bf16.msra.mxu0 0
        %1683 = vmatprep.subr.bf16.mxu0 0
        %1684 = vmatpush1.bf16.msra.mxu0 0
        %1685 = vmatprep.subr.bf16.mxu0 0
        %1686 = vmatpush1.bf16.msra.mxu0 0
        %1687 = vmatprep.subr.bf16.mxu0 0
        %1688 = vmatpush1.bf16.msra.mxu0 0
        %1689 = vmatprep.subr.bf16.mxu0 0
        %1690 = vmatpush1.bf16.msra.mxu0 0
        %1691 = vmatprep.subr.bf16.mxu0 0
        %1692 = vmatpush1.bf16.msra.mxu0 0
        %1693 = vmatprep.mubr.bf16.mxu0 0
        %1694 = vmatmul.mubr.bf16.gmra.mrb[0].mxu0 %v1656
        %v1695 = vpop.f32.mrb[0].mxu0
        %v1696 = vadd.f32 0.0, %v1695
        %v1697 = vpop.f32.mrb[0].mxu0
        %v1698 = vpop.f32.mrb[0].mxu0
        %v1699 = vpop.f32.mrb[0].mxu0
        %1700 = vdwg.mxu0
        %1702 = vrot.lane.b32.xlu0 %v1474, 16
        %v1703 = vpop.permute.xlu0 %1702
        %1706 = vrot.lane.b32.xlu0 %v1585, 32
        %v1707 = vpop.permute.xlu0 %1706
        %1710 = vrot.lane.b32.xlu0 %v1696, 48
        %v1711 = vpop.permute.xlu0 %1710
        %v1713 = vsel %vm1256, %v1362, %v1703
        %vm1714 = vcmask 261120
        %v1715 = vsel %vm1714, %v1713, %v1707
        %vm1716 = vcmask 392192
        %v1717 = vsel %vm1716, %v1715, %v1711
        %v1718 = vld [vmem:[%s562] sm:$0xf]
        %v1719 = vld [vmem:[%s562 + $0x4] sm:$0xf]
        %v1720 = vld [vmem:[%s562 + $0x8] sm:$0xf]
        %v1721 = vld [vmem:[%s562 + $0xc] sm:$0xf]
        %v1722 = vld [vmem:[%s562 + $0x10] sm:$0xf]
        %v1723 = vld [vmem:[%s562 + $0x14] sm:$0xf]
        %v1724 = vld [vmem:[%s562 + $0x18] sm:$0xf]
        %v1725 = vld [vmem:[%s562 + $0x1c] sm:$0xf]
        %v1726 = vpack.c.bf16 %v1717, %v1717
        %v1727 = vlaneseq
        %v1728 = vshrl.u32 %v1727, 7
        %v1729 = vsub.s32 4, %v1728
        %v1730 = vrot.slane %v1117, %v1729
        %v1739 = vunpack.c.l.b16 %v1718
        %v1740 = vunpack.c.l.b16 %v1719
        %v1741 = vunpack.c.l.b16 %v1720
        %v1742 = vunpack.c.l.b16 %v1721
        %v1743 = vunpack.c.l.b16 %v1722
        %v1744 = vunpack.c.l.b16 %v1723
        %v1745 = vunpack.c.l.b16 %v1724
        %v1746 = vunpack.c.l.b16 %v1725
        %v1747 = vpack.c.b16 %v1740, %v1739
        %v1748 = vpack.c.b16 %v1742, %v1741
        %v1749 = vpack.c.b16 %v1744, %v1743
        %v1750 = vpack.c.b16 %v1746, %v1745
        %v1756 = vsel %vm1119, %v1726, 0
        %1758 = vmatprep.subr.bf16.mxu0 0
        %1759 = vmatpush1.bf16.msra.mxu0 %v1747
        %1760 = vmatprep.subr.bf16.mxu0 0
        %1761 = vmatpush1.bf16.msra.mxu0 %v1748
        %1762 = vmatprep.subr.bf16.mxu0 0
        %1763 = vmatpush1.bf16.msra.mxu0 %v1749
        %1764 = vmatprep.subr.bf16.mxu0 0
        %1765 = vmatpush1.bf16.msra.mxu0 %v1750
        %1766 = vmatprep.subr.bf16.mxu0 0
        %1767 = vmatpush1.bf16.msra.mxu0 0
        %1768 = vmatprep.subr.bf16.mxu0 0
        %1769 = vmatpush1.bf16.msra.mxu0 0
        %1770 = vmatprep.subr.bf16.mxu0 0
        %1771 = vmatpush1.bf16.msra.mxu0 0
        %1772 = vmatprep.subr.bf16.mxu0 0
        %1773 = vmatpush1.bf16.msra.mxu0 0
        %1774 = vmatprep.subr.bf16.mxu0 0
        %1775 = vmatpush1.bf16.msra.mxu0 0
        %1776 = vmatprep.subr.bf16.mxu0 0
        %1777 = vmatpush1.bf16.msra.mxu0 0
        %1778 = vmatprep.subr.bf16.mxu0 0
        %1779 = vmatpush1.bf16.msra.mxu0 0
        %1780 = vmatprep.subr.bf16.mxu0 0
        %1781 = vmatpush1.bf16.msra.mxu0 0
        %1782 = vmatprep.subr.bf16.mxu0 0
        %1783 = vmatpush1.bf16.msra.mxu0 0
        %1784 = vmatprep.subr.bf16.mxu0 0
        %1785 = vmatpush1.bf16.msra.mxu0 0
        %1786 = vmatprep.subr.bf16.mxu0 0
        %1787 = vmatpush1.bf16.msra.mxu0 0
        %1788 = vmatprep.subr.bf16.mxu0 0
        %1789 = vmatpush1.bf16.msra.mxu0 0
        %1790 = vmatprep.mubr.bf16.mxu0 0
        %1791 = vmatmul.mubr.bf16.gmra.mrb[0].mxu0 %v1756
        %v1792 = vpop.f32.mrb[0].mxu0
        %v1793 = vadd.f32 %v1730, %v1792
        %v1794 = vpop.f32.mrb[0].mxu0
        %v1795 = vpop.f32.mrb[0].mxu0
        %v1796 = vpop.f32.mrb[0].mxu0
        %1797 = vdwg.mxu0
        %v1798 = vadd.f32 %v1118, %v1793
        %v1799 = vsel %vm1119, %v1798, 0.0
        %1800 = vadd.xlane.f32.xlu0 %v1799
        %v1801 = vpop.xlane.xlu0 %1800
        %v1802 = vmul.f32 %v1801, %v1123
        %v1803 = vsub.f32 %v1798, %v1802
        %v1804 = vmul.f32 %v1803, %v1803
        %v1805 = vsel %vm1119, %v1804, 0.0
        %1806 = vadd.xlane.f32.xlu0 %v1805
        %v1807 = vpop.xlane.xlu0 %1806
        %v1808 = vmul.f32 %v1807, %v1123
        %v1809 = vadd.f32 %v1808, 1e-06
        %v1810 = vrsqrt.pop %v1809
        %v1811 = vmul.f32 %v1803, %v1810
        %v1812 = vlaneseq
        %v1813 = vshrl.u32 %v1812, 7
        %v1814 = vsub.s32 2, %v1813
        %v1815 = vrot.slane %v1117, %v1814
        %v1816 = vmul.f32 %v1811, %v1815
        %v1817 = vlaneseq
        %v1818 = vshrl.u32 %v1817, 7
        %v1819 = vsub.s32 3, %v1818
        %v1820 = vrot.slane %v1117, %v1819
        %v1821 = vadd.f32 %v1816, %v1820
        %v1822 = vld [vmem:[%s567] sm:$0xff]
        %v1823 = vld [vmem:[%s567 + $0x8] sm:$0xff]
        %v1824 = vld [vmem:[%s567 + $0x10] sm:$0xff]
        %v1825 = vld [vmem:[%s567 + $0x18] sm:$0xff]
        %v1826 = vld [vmem:[%s567 + $0x20] sm:$0xff]
        %v1827 = vld [vmem:[%s567 + $0x28] sm:$0xff]
        %v1828 = vld [vmem:[%s567 + $0x30] sm:$0xff]
        %v1829 = vld [vmem:[%s567 + $0x38] sm:$0xff]
        %v1830 = vld [vmem:[%s571] sm:$0x3]
        %v1831 = vpack.c.bf16 %v1821, %v1821
        %v1833 = vlaneseq
        %v1834 = vshrl.u32 %v1833, 7
        %v1835 = vsub.s32 0, %v1834
        %v1836 = vrot.slane %v1830, %v1835
        %v1837 = vlaneseq
        %v1838 = vshrl.u32 %v1837, 7
        %v1839 = vsub.s32 1, %v1838
        %v1840 = vrot.slane %v1830, %v1839
        %v1851 = vunpack.c.l.b16 %v1822
        %v1852 = vunpack.c.h.b16 %v1822
        %v1853 = vunpack.c.l.b16 %v1823
        %v1854 = vunpack.c.h.b16 %v1823
        %v1855 = vunpack.c.l.b16 %v1824
        %v1856 = vunpack.c.h.b16 %v1824
        %v1857 = vunpack.c.l.b16 %v1825
        %v1858 = vunpack.c.h.b16 %v1825
        %v1859 = vunpack.c.l.b16 %v1826
        %v1860 = vunpack.c.h.b16 %v1826
        %v1861 = vunpack.c.l.b16 %v1827
        %v1862 = vunpack.c.h.b16 %v1827
        %v1863 = vunpack.c.l.b16 %v1828
        %v1864 = vunpack.c.h.b16 %v1828
        %v1865 = vunpack.c.l.b16 %v1829
        %v1866 = vunpack.c.h.b16 %v1829
        %v1867 = vpack.c.b16 %v1853, %v1851
        %v1868 = vpack.c.b16 %v1854, %v1852
        %v1869 = vpack.c.b16 %v1857, %v1855
        %v1870 = vpack.c.b16 %v1858, %v1856
        %v1871 = vpack.c.b16 %v1861, %v1859
        %v1872 = vpack.c.b16 %v1862, %v1860
        %v1873 = vpack.c.b16 %v1865, %v1863
        %v1874 = vpack.c.b16 %v1866, %v1864
        %v1884 = vsel %vm1119, %v1831, 0
        %1886 = vmatprep.subr.bf16.mxu0 %v1868
        %1887 = vmatpush1.bf16.msra.mxu0 %v1867
        %1888 = vmatprep.subr.bf16.mxu0 %v1870
        %1889 = vmatpush1.bf16.msra.mxu0 %v1869
        %1890 = vmatprep.subr.bf16.mxu0 %v1872
        %1891 = vmatpush1.bf16.msra.mxu0 %v1871
        %1892 = vmatprep.subr.bf16.mxu0 %v1874
        %1893 = vmatpush1.bf16.msra.mxu0 %v1873
        %1894 = vmatprep.subr.bf16.mxu0 0
        %1895 = vmatpush1.bf16.msra.mxu0 0
        %1896 = vmatprep.subr.bf16.mxu0 0
        %1897 = vmatpush1.bf16.msra.mxu0 0
        %1898 = vmatprep.subr.bf16.mxu0 0
        %1899 = vmatpush1.bf16.msra.mxu0 0
        %1900 = vmatprep.subr.bf16.mxu0 0
        %1901 = vmatpush1.bf16.msra.mxu0 0
        %1902 = vmatprep.subr.bf16.mxu0 0
        %1903 = vmatpush1.bf16.msra.mxu0 0
        %1904 = vmatprep.subr.bf16.mxu0 0
        %1905 = vmatpush1.bf16.msra.mxu0 0
        %1906 = vmatprep.subr.bf16.mxu0 0
        %1907 = vmatpush1.bf16.msra.mxu0 0
        %1908 = vmatprep.subr.bf16.mxu0 0
        %1909 = vmatpush1.bf16.msra.mxu0 0
        %1910 = vmatprep.subr.bf16.mxu0 0
        %1911 = vmatpush1.bf16.msra.mxu0 0
        %1912 = vmatprep.subr.bf16.mxu0 0
        %1913 = vmatpush1.bf16.msra.mxu0 0
        %1914 = vmatprep.subr.bf16.mxu0 0
        %1915 = vmatpush1.bf16.msra.mxu0 0
        %1916 = vmatprep.subr.bf16.mxu0 0
        %1917 = vmatpush1.bf16.msra.mxu0 0
        %1918 = vmatprep.mubr.bf16.mxu0 0
        %1919 = vmatmul.mubr.bf16.gmra.mrb[0].mxu0 %v1884
        %v1920 = vpop.f32.mrb[0].mxu0
        %v1921 = vadd.f32 %v1836, %v1920
        %v1922 = vpop.f32.mrb[0].mxu0
        %v1923 = vadd.f32 %v1840, %v1922
        %v1924 = vpop.f32.mrb[0].mxu0
        %v1925 = vpop.f32.mrb[0].mxu0
        %1926 = vdwg.mxu0
        %v1927 = vmul.f32 %v1921, %v1921
        %v1928 = vmul.f32 %v1923, %v1923
        %v1929 = vmul.f32 %v1921, %v1927
        %v1930 = vmul.f32 %v1923, %v1928
        %v1931 = vmul.f32 %v1929, 0.044715
        %v1932 = vmul.f32 %v1930, 0.044715
        %v1933 = vadd.f32 %v1921, %v1931
        %v1934 = vadd.f32 %v1923, %v1932
        %v1935 = vmul.f32 %v1933, 0.7978846
        %v1936 = vmul.f32 %v1934, 0.7978846
        %v1937 = vtanh.pop %v1935
        %v1938 = vtanh.pop %v1936
        %v1939 = vadd.f32 %v1937, 1.0
        %v1940 = vadd.f32 %v1938, 1.0
        %v1941 = vmul.f32 %v1939, 0.5
        %v1942 = vmul.f32 %v1940, 0.5
        %v1943 = vmul.f32 %v1921, %v1941
        %v1944 = vmul.f32 %v1923, %v1942
        %v1945 = vld [vmem:[%s576] sm:$0xf]
        %v1946 = vld [vmem:[%s576 + $0x4] sm:$0xf]
        %v1947 = vld [vmem:[%s576 + $0x8] sm:$0xf]
        %v1948 = vld [vmem:[%s576 + $0xc] sm:$0xf]
        %v1949 = vld [vmem:[%s576 + $0x10] sm:$0xf]
        %v1950 = vld [vmem:[%s576 + $0x14] sm:$0xf]
        %v1951 = vld [vmem:[%s576 + $0x18] sm:$0xf]
        %v1952 = vld [vmem:[%s576 + $0x1c] sm:$0xf]
        %v1953 = vld [vmem:[%s576 + $0x20] sm:$0xf]
        %v1954 = vld [vmem:[%s576 + $0x24] sm:$0xf]
        %v1955 = vld [vmem:[%s576 + $0x28] sm:$0xf]
        %v1956 = vld [vmem:[%s576 + $0x2c] sm:$0xf]
        %v1957 = vld [vmem:[%s576 + $0x30] sm:$0xf]
        %v1958 = vld [vmem:[%s576 + $0x34] sm:$0xf]
        %v1959 = vld [vmem:[%s576 + $0x38] sm:$0xf]
        %v1960 = vld [vmem:[%s576 + $0x3c] sm:$0xf]
        %v1961 = vld [vmem:[%s576 + $0x40] sm:$0xf]
        %v1962 = vld [vmem:[%s576 + $0x44] sm:$0xf]
        %v1963 = vld [vmem:[%s576 + $0x48] sm:$0xf]
        %v1964 = vld [vmem:[%s576 + $0x4c] sm:$0xf]
        %v1965 = vld [vmem:[%s576 + $0x50] sm:$0xf]
        %v1966 = vld [vmem:[%s576 + $0x54] sm:$0xf]
        %v1967 = vld [vmem:[%s576 + $0x58] sm:$0xf]
        %v1968 = vld [vmem:[%s576 + $0x5c] sm:$0xf]
        %v1969 = vld [vmem:[%s576 + $0x60] sm:$0xf]
        %v1970 = vld [vmem:[%s576 + $0x64] sm:$0xf]
        %v1971 = vld [vmem:[%s576 + $0x68] sm:$0xf]
        %v1972 = vld [vmem:[%s576 + $0x6c] sm:$0xf]
        %v1973 = vld [vmem:[%s576 + $0x70] sm:$0xf]
        %v1974 = vld [vmem:[%s576 + $0x74] sm:$0xf]
        %v1975 = vld [vmem:[%s576 + $0x78] sm:$0xf]
        %v1976 = vld [vmem:[%s576 + $0x7c] sm:$0xf]
        %v1977 = vpack.c.bf16 %v1943, %v1943
        %v1978 = vpack.c.bf16 %v1944, %v1944
        %v1979 = vlaneseq
        %v1980 = vshrl.u32 %v1979, 7
        %v1981 = vsub.s32 5, %v1980
        %v1982 = vrot.slane %v1117, %v1981
        %v2015 = vunpack.c.l.b16 %v1945
        %v2016 = vunpack.c.l.b16 %v1946
        %v2017 = vunpack.c.l.b16 %v1947
        %v2018 = vunpack.c.l.b16 %v1948
        %v2019 = vunpack.c.l.b16 %v1949
        %v2020 = vunpack.c.l.b16 %v1950
        %v2021 = vunpack.c.l.b16 %v1951
        %v2022 = vunpack.c.l.b16 %v1952
        %v2023 = vunpack.c.l.b16 %v1953
        %v2024 = vunpack.c.l.b16 %v1954
        %v2025 = vunpack.c.l.b16 %v1955
        %v2026 = vunpack.c.l.b16 %v1956
        %v2027 = vunpack.c.l.b16 %v1957
        %v2028 = vunpack.c.l.b16 %v1958
        %v2029 = vunpack.c.l.b16 %v1959
        %v2030 = vunpack.c.l.b16 %v1960
        %v2031 = vunpack.c.l.b16 %v1961
        %v2032 = vunpack.c.l.b16 %v1962
        %v2033 = vunpack.c.l.b16 %v1963
        %v2034 = vunpack.c.l.b16 %v1964
        %v2035 = vunpack.c.l.b16 %v1965
        %v2036 = vunpack.c.l.b16 %v1966
        %v2037 = vunpack.c.l.b16 %v1967
        %v2038 = vunpack.c.l.b16 %v1968
        %v2039 = vunpack.c.l.b16 %v1969
        %v2040 = vunpack.c.l.b16 %v1970
        %v2041 = vunpack.c.l.b16 %v1971
        %v2042 = vunpack.c.l.b16 %v1972
        %v2043 = vunpack.c.l.b16 %v1973
        %v2044 = vunpack.c.l.b16 %v1974
        %v2045 = vunpack.c.l.b16 %v1975
        %v2046 = vunpack.c.l.b16 %v1976
        %v2047 = vpack.c.b16 %v2016, %v2015
        %v2048 = vpack.c.b16 %v2018, %v2017
        %v2049 = vpack.c.b16 %v2020, %v2019
        %v2050 = vpack.c.b16 %v2022, %v2021
        %v2051 = vpack.c.b16 %v2024, %v2023
        %v2052 = vpack.c.b16 %v2026, %v2025
        %v2053 = vpack.c.b16 %v2028, %v2027
        %v2054 = vpack.c.b16 %v2030, %v2029
        %v2055 = vpack.c.b16 %v2032, %v2031
        %v2056 = vpack.c.b16 %v2034, %v2033
        %v2057 = vpack.c.b16 %v2036, %v2035
        %v2058 = vpack.c.b16 %v2038, %v2037
        %v2059 = vpack.c.b16 %v2040, %v2039
        %v2060 = vpack.c.b16 %v2042, %v2041
        %v2061 = vpack.c.b16 %v2044, %v2043
        %v2062 = vpack.c.b16 %v2046, %v2045
        %2079 = vmatprep.subr.bf16.mxu0 0
        %2080 = vmatpush1.bf16.msra.mxu0 %v2047
        %2081 = vmatprep.subr.bf16.mxu0 0
        %2082 = vmatpush1.bf16.msra.mxu0 %v2048
        %2083 = vmatprep.subr.bf16.mxu0 0
        %2084 = vmatpush1.bf16.msra.mxu0 %v2049
        %2085 = vmatprep.subr.bf16.mxu0 0
        %2086 = vmatpush1.bf16.msra.mxu0 %v2050
        %2087 = vmatprep.subr.bf16.mxu0 0
        %2088 = vmatpush1.bf16.msra.mxu0 %v2051
        %2089 = vmatprep.subr.bf16.mxu0 0
        %2090 = vmatpush1.bf16.msra.mxu0 %v2052
        %2091 = vmatprep.subr.bf16.mxu0 0
        %2092 = vmatpush1.bf16.msra.mxu0 %v2053
        %2093 = vmatprep.subr.bf16.mxu0 0
        %2094 = vmatpush1.bf16.msra.mxu0 %v2054
        %2095 = vmatprep.subr.bf16.mxu0 0
        %2096 = vmatpush1.bf16.msra.mxu0 %v2055
        %2097 = vmatprep.subr.bf16.mxu0 0
        %2098 = vmatpush1.bf16.msra.mxu0 %v2056
        %2099 = vmatprep.subr.bf16.mxu0 0
        %2100 = vmatpush1.bf16.msra.mxu0 %v2057
        %2101 = vmatprep.subr.bf16.mxu0 0
        %2102 = vmatpush1.bf16.msra.mxu0 %v2058
        %2103 = vmatprep.subr.bf16.mxu0 0
        %2104 = vmatpush1.bf16.msra.mxu0 %v2059
        %2105 = vmatprep.subr.bf16.mxu0 0
        %2106 = vmatpush1.bf16.msra.mxu0 %v2060
        %2107 = vmatprep.subr.bf16.mxu0 0
        %2108 = vmatpush1.bf16.msra.mxu0 %v2061
        %2109 = vmatprep.subr.bf16.mxu0 0
        %2110 = vmatpush1.bf16.msra.mxu0 %v2062
        %2111 = vmatprep.mubr.bf16.mxu0 %v1978
        %2112 = vmatmul.mubr.bf16.gmra.mrb[0].mxu0 %v1977
        %v2113 = vpop.f32.mrb[0].mxu0
        %v2114 = vadd.f32 %v1982, %v2113
        %v2115 = vpop.f32.mrb[0].mxu0
        %v2116 = vpop.f32.mrb[0].mxu0
        %v2117 = vpop.f32.mrb[0].mxu0
        %2118 = vdwg.mxu0
        %v2119 = vadd.f32 %v1798, %v2114
        %2120 = vst.msk [vmem:[#allocation2] sm:$0xff] %vm1119, %v2119
        %p2121 = scmp.eq.s32.totalorder %s32, 1
        // Predicated region
        $region77: #{vit_forward.1} parent=71 // pred_check
          %p2122 = pneg %p2121
        $region78: #{vit_forward.1} parent=71 // pred_check_branch
          %2124 = sbr.rel (%p2122) target = $region80
        $region79: #{vit_forward.1} parent=71 // pred_region
          %v2125 = vld [vmem:[%s11] sm:$0x1]
          %v2126 = vld [vmem:[%s11 + $0x1] sm:$0x1]
          %vm2127 = vcmask 516096
          %v2128 = vsel %vm2127, %v2119, 0.0
          %2129 = vadd.xlane.f32.xlu0 %v2128
          %v2130 = vpop.xlane.xlu0 %2129
          %v2131 = vmul.f32 %v2130, %v1123
          %v2132 = vsub.f32 %v2119, %v2131
          %v2133 = vmul.f32 %v2132, %v2132
          %v2134 = vsel %vm2127, %v2133, 0.0
          %2135 = vadd.xlane.f32.xlu0 %v2134
          %v2136 = vpop.xlane.xlu0 %2135
          %v2137 = vmul.f32 %v2136, %v1123
          %v2138 = vadd.f32 %v2137, 1e-06
          %v2139 = vrsqrt.pop %v2138
          %v2140 = vmul.f32 %v2132, %v2139
          %v2141 = vmul.f32 %v2140, %v2125
          %v2142 = vadd.f32 %v2141, %v2126
          %v2143 = vld [vmem:[%s10] sm:$0xf]
          %v2144 = vld [vmem:[%s10 + $0x4] sm:$0xf]
          %v2145 = vld [vmem:[%s10 + $0x8] sm:$0xf]
          %v2146 = vld [vmem:[%s10 + $0xc] sm:$0xf]
          %v2147 = vld [vmem:[%s10 + $0x10] sm:$0xf]
          %v2148 = vld [vmem:[%s10 + $0x14] sm:$0xf]
          %v2149 = vld [vmem:[%s10 + $0x18] sm:$0xf]
          %v2150 = vld [vmem:[%s10 + $0x1c] sm:$0xf]
          %v2151 = vld [vmem:[%s12] sm:$0x1]
          %v2152 = vpack.c.bf16 %v2142, %v2142
          %v2161 = vunpack.c.l.b16 %v2143
          %v2162 = vunpack.c.l.b16 %v2144
          %v2163 = vunpack.c.l.b16 %v2145
          %v2164 = vunpack.c.l.b16 %v2146
          %v2165 = vunpack.c.l.b16 %v2147
          %v2166 = vunpack.c.l.b16 %v2148
          %v2167 = vunpack.c.l.b16 %v2149
          %v2168 = vunpack.c.l.b16 %v2150
          %v2169 = vpack.c.b16 %v2162, %v2161
          %v2170 = vpack.c.b16 %v2164, %v2163
          %v2171 = vpack.c.b16 %v2166, %v2165
          %v2172 = vpack.c.b16 %v2168, %v2167
          %v2178 = vsel %vm1119, %v2152, 0
          %2180 = vmatprep.subr.bf16.mxu0 0
          %2181 = vmatpush1.bf16.msra.mxu0 %v2169
          %2182 = vmatprep.subr.bf16.mxu0 0
          %2183 = vmatpush1.bf16.msra.mxu0 %v2170
          %2184 = vmatprep.subr.bf16.mxu0 0
          %2185 = vmatpush1.bf16.msra.mxu0 %v2171
          %2186 = vmatprep.subr.bf16.mxu0 0
          %2187 = vmatpush1.bf16.msra.mxu0 %v2172
          %2188 = vmatprep.subr.bf16.mxu0 0
          %2189 = vmatpush1.bf16.msra.mxu0 0
          %2190 = vmatprep.subr.bf16.mxu0 0
          %2191 = vmatpush1.bf16.msra.mxu0 0
          %2192 = vmatprep.subr.bf16.mxu0 0
          %2193 = vmatpush1.bf16.msra.mxu0 0
          %2194 = vmatprep.subr.bf16.mxu0 0
          %2195 = vmatpush1.bf16.msra.mxu0 0
          %2196 = vmatprep.subr.bf16.mxu0 0
          %2197 = vmatpush1.bf16.msra.mxu0 0
          %2198 = vmatprep.subr.bf16.mxu0 0
          %2199 = vmatpush1.bf16.msra.mxu0 0
          %2200 = vmatprep.subr.bf16.mxu0 0
          %2201 = vmatpush1.bf16.msra.mxu0 0
          %2202 = vmatprep.subr.bf16.mxu0 0
          %2203 = vmatpush1.bf16.msra.mxu0 0
          %2204 = vmatprep.subr.bf16.mxu0 0
          %2205 = vmatpush1.bf16.msra.mxu0 0
          %2206 = vmatprep.subr.bf16.mxu0 0
          %2207 = vmatpush1.bf16.msra.mxu0 0
          %2208 = vmatprep.subr.bf16.mxu0 0
          %2209 = vmatpush1.bf16.msra.mxu0 0
          %2210 = vmatprep.subr.bf16.mxu0 0
          %2211 = vmatpush1.bf16.msra.mxu0 0
          %2212 = vmatprep.mubr.bf16.mxu0 0
          %2213 = vmatmul.mubr.bf16.gmra.mrb[0].mxu0 %v2178
          %v2214 = vpop.f32.mrb[0].mxu0
          %v2215 = vadd.f32 %v2151, %v2214
          %v2216 = vpop.f32.mrb[0].mxu0
          %v2217 = vpop.f32.mrb[0].mxu0
          %v2218 = vpop.f32.mrb[0].mxu0
          %2219 = vdwg.mxu0
          %2220 = vst [vmem:[%s543] sm:$0x1] %v2215
        $region80: #{vit_forward.1} parent=71 // pred_fallthru
          _
        %s2221 = sand.u32 %s360, 1
        %s2222 = scalar_lea.sflag [#allocation4], %s2221
        %s2223 = sand.u32 %s360, 1
        %s2224 = scalar_lea.vmem [#allocation3], %s2223
        // Predicated region
        $region81: #{vit_forward.1} parent=71 // pred_check
          %p2225 = pneg %p370
        $region82: #{vit_forward.1} parent=71 // pred_check_branch
          %2227 = sbr.rel (%p2225) target = $region84
        $region83: #{vit_forward.1} parent=71 // pred_region
          %s2229 = ssub.s32 16, 16
          %2230 = vsyncadd %s2222, %s2229
          %s2231 = smul.addr %s31, 16
          %s2232 = scalar_lea.hbm %s13, %s2231
          %s2234 = sshll.u32 %s2224, 4
          %s2235 = int_to_ptr.vmem [resolvable:$true] %s2234
          %2237 = dma.vmem_to_hbm [thread:$0]  %s2235, 16, %s2232, %s2222
        $region84: #{vit_forward.1} parent=71 // pred_fallthru
          _
      $region72: #{vit_forward.1} parent=5 // pred_fallthru
        _
      %p2238 = scmp.le.s32.totalorder 2, %s22
      // Predicated region
      $region85: #{vit_forward.1} parent=5 // pred_check
        %p2239 = pneg %p2238
      $region86: #{vit_forward.1} parent=5 // pred_check_branch
        %2241 = sbr.rel (%p2239) target = $region88
      $region87: #{vit_forward.1} parent=5 // pred_region
        %s2242 = ssub.s32 %s22, 2
        // Predicated region
        $region89: #{vit_forward.1} parent=87 // pred_check
          %p2243 = pneg %p376
        $region90: #{vit_forward.1} parent=87 // pred_check_branch
          %2245 = sbr.rel (%p2243) target = $region92
        $region91: #{vit_forward.1} parent=87 // pred_region
          %s2246 = sand.u32 %s361, 1
          %s2247 = scalar_lea.sflag [#allocation4], %s2246
          %s2248 = sand.u32 %s361, 1
          %s2249 = scalar_lea.vmem [#allocation3], %s2248
          %2250 = dma.done %s2247, 16
        $region92: #{vit_forward.1} parent=87 // pred_fallthru
          _
      $region88: #{vit_forward.1} parent=5 // pred_fallthru
        _
    $region6: #{vit_forward.1} parent=1 // loop_footer
      %s26 = sadd.s32 1, %s22
    $region7: #{vit_forward.1} parent=1 // loop_footer_branch
      %21 = sbr.rel target = $region3
    $region8: #{vit_forward.1} parent=1 // loop_exit
      _
    %2251 = vsyncpa [#allocation4], 1
    %s2252 = scalar_lea.sflag [#allocation4], 1
    %2253 = vsyncpa %s2252, 1

</llo_original>
